<compile_context>
chip_gen: v6e
topology: v6e:2x2x1
jax: 0.10.0
libtpu: 0.0.40
codegen_flags: <defaults>
</compile_context>

<pallas_src>
import functools
import math

import jax
import jax.numpy as jnp
from jax import lax
from jax.experimental import pallas as pl
from jax.experimental.pallas import tpu as pltpu


def _mha_kernel(q_ref, k_ref, v_ref,
                wq_ref, bq_ref, wk_ref, bk_ref, wv_ref, bv_ref,
                wo_ref, bo_ref, o_ref, *, num_head, scale):
    """Fused MHA forward for one (batch, query-tile) grid step.

    q block: [1, tq, D] bf16; k/v blocks: [1, S, D] bf16;
    weights: [D_in, D_out] bf16 (pre-transposed in wrapper); biases: [1, D] f32;
    output block: [1, tq, D] in the original input dtype.
    """
    f32 = jnp.float32
    bf16 = jnp.bfloat16

    def proj(x, w_ref, b_ref):
        # Canonical minor-major contraction; MXU with f32 accumulation.
        y = jnp.dot(x, w_ref[...], preferred_element_type=f32)
        return y + b_ref[...]                                   # [rows, D] f32

    x_q = q_ref[0]                                              # [tq, D] bf16
    x_k = k_ref[0]                                              # [S,  D] bf16
    x_v = v_ref[0]

    # Fold 1/sqrt(Dh) into the (small) Q projection instead of the score matrix.
    qp = proj(x_q, wq_ref, bq_ref) * scale                      # [tq, D] f32
    kp = proj(x_k, wk_ref, bk_ref)                              # [S, D]  f32
    vp = proj(x_v, wv_ref, bv_ref)                              # [S, D]  f32

    tq, d_model = qp.shape
    s_kv = kp.shape[0]
    d_head = d_model // num_head

    def to_heads(x):
        # [rows, D] f32 -> [H, rows, Dh] bf16 (heads leading = batch dim of the
        # dot_generals below). One relayout per operand instead of H lane
        # slices; cast to bf16 afterwards for the MXU.
        rows = x.shape[0]
        return jnp.transpose(x.reshape(rows, num_head, d_head),
                             (1, 0, 2)).astype(bf16)

    qh = to_heads(qp)                                           # [H, tq, Dh]
    kh = to_heads(kp)                                           # [H, S,  Dh]
    vh = to_heads(vp)                                           # [H, S,  Dh]

    # scores[h, q, k] = sum_d qh[h,q,d] * kh[h,k,d]  (batched over heads, no .T)
    sc = lax.dot_general(qh, kh, (((2,), (2,)), ((0,), (0,))),
                         preferred_element_type=f32)            # [H, tq, S] f32
    sc = sc - jnp.max(sc, axis=-1, keepdims=True)
    p = jnp.exp(sc)
    p = p * pl.reciprocal(jnp.sum(p, axis=-1, keepdims=True), approx=True)

    # attn[h, q, d] = sum_k p[h,q,k] * vh[h,k,d]
    attn = lax.dot_general(p.astype(bf16), vh, (((2,), (1,)), ((0,), (0,))),
                           preferred_element_type=f32)          # [H, tq, Dh] f32
    # Put the heads back onto the lane axis: [H, tq, Dh] -> [tq, H*Dh] = [tq, D].
    attn = jnp.transpose(attn, (1, 0, 2)).reshape(tq, d_model)

    out = jnp.dot(attn.astype(bf16), wo_ref[...],
                  preferred_element_type=f32) + bo_ref[...]     # [tq, D] f32
    o_ref[0] = out.astype(o_ref.dtype)


def _ceil_to(x, m):
    return -(-x // m) * m


def _tile_bytes(shape, dtype, buffers=1):
    """Coarse VMEM footprint of one (8,128)-padded block, times `buffers`."""
    dims = list(shape)
    dims[-1] = _ceil_to(dims[-1], 128)
    if len(dims) >= 2:
        dims[-2] = _ceil_to(dims[-2], 8)
    n = 1
    for d in dims:
        n *= d
    return n * jnp.dtype(dtype).itemsize * buffers


def multi_head_attention(params, q, k, v, num_head, *, q_tile=256):
    """q, k, v: [B, S, D] -> [B, S, D]. Single fused pallas_call, grid (B, S//tq)."""
    b, s, d_model = q.shape
    assert d_model % num_head == 0, "d_model must be divisible by num_head"
    d_head = d_model // num_head
    scale = 1.0 / math.sqrt(d_head)
    out_dtype = q.dtype

    # Query-row tiling: extra "parallel" grid axis so both v7x TensorCores get
    # work even at tiny batch sizes; keeps per-step VMEM O(tq*D + S*D).
    tq = q_tile if (s % q_tile == 0) else s

    bf16 = jnp.bfloat16
    # bf16 operands for the MXU; biases stay f32 (added after f32 accumulation).
    qx, kx, vx = (t.astype(bf16) for t in (q, k, v))

    def prep_w(name):
        w, bias = params[name]
        # One-time transpose to [D_in, D_out] in the wrapper so the kernel does a
        # plain minor-major contraction (no in-kernel weight transpose per step).
        return jnp.asarray(w).T.astype(bf16), \
               jnp.asarray(bias).reshape(1, d_model).astype(jnp.float32)

    wq, bq = prep_w("w_q")
    wk, bk = prep_w("w_k")
    wv, bv = prep_w("w_v")
    wo, bo = prep_w("w_concat")

    grid = (b, s // tq)

    q_spec = pl.BlockSpec((1, tq, d_model), lambda i, j: (i, j, 0))
    kv_spec = pl.BlockSpec((1, s, d_model), lambda i, j: (i, 0, 0))
    # Constant index map -> block DMA'd once; single-buffered to halve its VMEM.
    w_spec = pl.BlockSpec((d_model, d_model), lambda i, j: (0, 0),
                          pipeline_mode=pl.Buffered(1))
    b_spec = pl.BlockSpec((1, d_model), lambda i, j: (0, 0),
                          pipeline_mode=pl.Buffered(1))
    out_spec = pl.BlockSpec((1, tq, d_model), lambda i, j: (i, j, 0))

    # Explicit scoped-VMEM budget from the actual block sizes plus in-kernel
    # intermediates; never below the 32 MiB default, capped at v7x's 64 MiB.
    est = (
        _tile_bytes((1, tq, d_model), bf16, 2)                    # q block (dbl-buf)
        + 2 * _tile_bytes((1, s, d_model), bf16, 2)               # k, v blocks
        + _tile_bytes((1, tq, d_model), out_dtype, 2)             # out block
        + 4 * _tile_bytes((d_model, d_model), bf16, 1)            # weights (Buffered(1))
        + 4 * _tile_bytes((1, d_model), jnp.float32, 1)           # biases
        + _tile_bytes((tq, d_model), jnp.float32, 1)              # qp
        + 2 * _tile_bytes((s, d_model), jnp.float32, 1)           # kp, vp
        + 3 * _tile_bytes((num_head, max(tq, s), d_head), bf16, 1)  # head-split q/k/v
        + 2 * _tile_bytes((num_head, tq, s), jnp.float32, 1)      # scores, probs
        + 2 * _tile_bytes((tq, d_model), jnp.float32, 1)          # attn, out
    )
    vmem_limit = int(min(max(2 * est + (2 << 20), 32 << 20), 64 << 20))

    return pl.pallas_call(
        functools.partial(_mha_kernel, num_head=num_head, scale=scale),
        out_shape=jax.ShapeDtypeStruct((b, s, d_model), out_dtype),
        grid=grid,
        in_specs=[q_spec, kv_spec, kv_spec,
                  w_spec, b_spec, w_spec, b_spec, w_spec, b_spec,
                  w_spec, b_spec],
        out_specs=out_spec,
        compiler_params=pltpu.CompilerParams(
            dimension_semantics=("parallel", "parallel"),
            vmem_limit_bytes=vmem_limit),
    )(qx, kx, vx, wq, bq, wk, bk, wv, bv, wo, bo)


def init_params(key, d_model):
    """Deterministic init mimicking nn.Linear defaults (U(-1/sqrt(fan_in), ...))."""
    params = {}
    bound = 1.0 / math.sqrt(d_model)
    for i, name in enumerate(["w_q", "w_k", "w_v", "w_concat"]):
        kw, kb = jax.random.split(jax.random.fold_in(key, i))
        w = jax.random.uniform(kw, (d_model, d_model), jnp.float32, -bound, bound)
        b = jax.random.uniform(kb, (d_model,), jnp.float32, -bound, bound)
        params[name] = (w, b)
    return params


if __name__ == "__main__":
    # d_model = 128 keeps every activation/output block lane-dense (last dim a
    # multiple of the 128-lane vreg width) -> no masked vst.msk partial stores.
    batch, seq, d_model, num_head = 2, 8, 128, 4

    key = jax.random.PRNGKey(0)
    kq, kk, kv, kp = jax.random.split(key, 4)
    q = jax.random.normal(kq, (batch, seq, d_model), jnp.float32)
    k = jax.random.normal(kk, (batch, seq, d_model), jnp.float32)
    v = jax.random.normal(kv, (batch, seq, d_model), jnp.float32)
    params = init_params(kp, d_model)

    out = multi_head_attention(params, q, k, v, num_head)
    out = jax.block_until_ready(out)

    # Reference: same math as the PyTorch module; matmul operands are rounded to
    # bf16 (mirroring the kernel's MXU inputs with f32 accumulation), softmax exact.
    def ref_forward(params, q, k, v):
        f32 = jnp.float32
        bf = lambda t: t.astype(jnp.bfloat16).astype(f32)

        def lin(x, name):
            w, bias = params[name]
            return bf(x) @ bf(w).T + bias

        b_, s_, d_ = q.shape
        dh = d_ // num_head
        qp, kp_, vp = lin(q, "w_q"), lin(k, "w_k"), lin(v, "w_v")

        def split(t):
            return t.reshape(b_, s_, num_head, dh).transpose(0, 2, 1, 3)

        qh, kh, vh = split(qp / math.sqrt(dh)), split(kp_), split(vp)
        sc = jnp.einsum("bhqd,bhkd->bhqk", bf(qh), bf(kh))
        p = jax.nn.softmax(sc, axis=-1)
        o = jnp.einsum("bhqk,bhkd->bhqd", bf(p), bf(vh))
        o = o.transpose(0, 2, 1, 3).reshape(b_, s_, d_)
        wo, bo = params["w_concat"]
        return bf(o) @ bf(wo).T + bo

    ref = ref_forward(params, q, k, v)
    # Tolerance covers the EUP approximate reciprocal in the kernel softmax and
    # bf16 / accumulation-order differences.
    assert jnp.allclose(out, ref, atol=2e-2, rtol=2e-2), "mismatch vs reference"

    print("KERNEL_OK")
</pallas_src>

<mosaic_0001>
module attributes {stable_mosaic.version = 11 : i64} {
  func.func @_mha_kernel(%arg0: i32, %arg1: i32, %arg2: memref<1x8x128xbf16, #tpu.memory_space<vmem>>, %arg3: memref<1x8x128xbf16, #tpu.memory_space<vmem>>, %arg4: memref<1x8x128xbf16, #tpu.memory_space<vmem>>, %arg5: memref<128x128xbf16, #tpu.memory_space<vmem>>, %arg6: memref<1x128xf32, #tpu.memory_space<vmem>>, %arg7: memref<128x128xbf16, #tpu.memory_space<vmem>>, %arg8: memref<1x128xf32, #tpu.memory_space<vmem>>, %arg9: memref<128x128xbf16, #tpu.memory_space<vmem>>, %arg10: memref<1x128xf32, #tpu.memory_space<vmem>>, %arg11: memref<128x128xbf16, #tpu.memory_space<vmem>>, %arg12: memref<1x128xf32, #tpu.memory_space<vmem>>, %arg13: memref<1x8x128xf32, #tpu.memory_space<vmem>>) attributes {dimension_semantics = [#tpu.dimension_semantics<parallel>, #tpu.dimension_semantics<parallel>], iteration_bounds = array<i64: 2, 1>, scalar_prefetch = 0 : i64, scratch_operands = 0 : i64, tpu.core_type = #tpu.core_type<tc>, window_params = [{transform_indices = @transform_0, window_bounds = array<i64: 1, 8, 128>}, {transform_indices = @transform_1, window_bounds = array<i64: 1, 8, 128>}, {transform_indices = @transform_2, window_bounds = array<i64: 1, 8, 128>}, {pipeline_mode = #tpu.pipeline_mode<synchronous>, transform_indices = @transform_3, window_bounds = array<i64: 128, 128>}, {pipeline_mode = #tpu.pipeline_mode<synchronous>, transform_indices = @transform_4, window_bounds = array<i64: 1, 128>}, {pipeline_mode = #tpu.pipeline_mode<synchronous>, transform_indices = @transform_5, window_bounds = array<i64: 128, 128>}, {pipeline_mode = #tpu.pipeline_mode<synchronous>, transform_indices = @transform_6, window_bounds = array<i64: 1, 128>}, {pipeline_mode = #tpu.pipeline_mode<synchronous>, transform_indices = @transform_7, window_bounds = array<i64: 128, 128>}, {pipeline_mode = #tpu.pipeline_mode<synchronous>, transform_indices = @transform_8, window_bounds = array<i64: 1, 128>}, {pipeline_mode = #tpu.pipeline_mode<synchronous>, transform_indices = @transform_9, window_bounds = array<i64: 128, 128>}, {pipeline_mode = #tpu.pipeline_mode<synchronous>, transform_indices = @transform_10, window_bounds = array<i64: 1, 128>}, {transform_indices = @transform_11, window_bounds = array<i64: 1, 8, 128>}]} {
    %c0 = arith.constant 0 : index
    %c0_0 = arith.constant 0 : index
    %c0_1 = arith.constant 0 : index
    %0 = vector.load %arg2[%c0, %c0_0, %c0_1] : memref<1x8x128xbf16, #tpu.memory_space<vmem>>, vector<1x8x128xbf16>
    %1 = vector.shape_cast %0 : vector<1x8x128xbf16> to vector<8x128xbf16>
    %c0_2 = arith.constant 0 : index
    %c0_3 = arith.constant 0 : index
    %c0_4 = arith.constant 0 : index
    %2 = vector.load %arg3[%c0_2, %c0_3, %c0_4] : memref<1x8x128xbf16, #tpu.memory_space<vmem>>, vector<1x8x128xbf16>
    %3 = vector.shape_cast %2 : vector<1x8x128xbf16> to vector<8x128xbf16>
    %c0_5 = arith.constant 0 : index
    %c0_6 = arith.constant 0 : index
    %c0_7 = arith.constant 0 : index
    %4 = vector.load %arg4[%c0_5, %c0_6, %c0_7] : memref<1x8x128xbf16, #tpu.memory_space<vmem>>, vector<1x8x128xbf16>
    %5 = vector.shape_cast %4 : vector<1x8x128xbf16> to vector<8x128xbf16>
    %c0_8 = arith.constant 0 : index
    %c0_9 = arith.constant 0 : index
    %6 = vector.load %arg5[%c0_8, %c0_9] : memref<128x128xbf16, #tpu.memory_space<vmem>>, vector<128x128xbf16>
    %cst = arith.constant dense<0.000000e+00> : vector<8x128xf32>
    %7 = tpu.matmul %1, %6, %cst {dimension_numbers = #tpu.dot_dimension_numbers<[1], [0], [0], [1], [0, 0, 1, 1], [], []>} : vector<8x128xbf16>, vector<128x128xbf16>, vector<8x128xf32> -> vector<8x128xf32>
    %c0_10 = arith.constant 0 : index
    %c0_11 = arith.constant 0 : index
    %8 = vector.load %arg6[%c0_10, %c0_11] : memref<1x128xf32, #tpu.memory_space<vmem>>, vector<1x128xf32>
    %9 = vector.broadcast %8 : vector<1x128xf32> to vector<8x128xf32>
    %10 = arith.addf %7, %9 : vector<8x128xf32>
    %cst_12 = arith.constant 0.176776692 : f32
    %11 = vector.broadcast %cst_12 : f32 to vector<8x128xf32>
    %12 = arith.mulf %10, %11 : vector<8x128xf32>
    %c0_13 = arith.constant 0 : index
    %c0_14 = arith.constant 0 : index
    %13 = vector.load %arg7[%c0_13, %c0_14] : memref<128x128xbf16, #tpu.memory_space<vmem>>, vector<128x128xbf16>
    %cst_15 = arith.constant dense<0.000000e+00> : vector<8x128xf32>
    %14 = tpu.matmul %3, %13, %cst_15 {dimension_numbers = #tpu.dot_dimension_numbers<[1], [0], [0], [1], [0, 0, 1, 1], [], []>} : vector<8x128xbf16>, vector<128x128xbf16>, vector<8x128xf32> -> vector<8x128xf32>
    %c0_16 = arith.constant 0 : index
    %c0_17 = arith.constant 0 : index
    %15 = vector.load %arg8[%c0_16, %c0_17] : memref<1x128xf32, #tpu.memory_space<vmem>>, vector<1x128xf32>
    %16 = vector.broadcast %15 : vector<1x128xf32> to vector<8x128xf32>
    %17 = arith.addf %14, %16 : vector<8x128xf32>
    %c0_18 = arith.constant 0 : index
    %c0_19 = arith.constant 0 : index
    %18 = vector.load %arg9[%c0_18, %c0_19] : memref<128x128xbf16, #tpu.memory_space<vmem>>, vector<128x128xbf16>
    %cst_20 = arith.constant dense<0.000000e+00> : vector<8x128xf32>
    %19 = tpu.matmul %5, %18, %cst_20 {dimension_numbers = #tpu.dot_dimension_numbers<[1], [0], [0], [1], [0, 0, 1, 1], [], []>} : vector<8x128xbf16>, vector<128x128xbf16>, vector<8x128xf32> -> vector<8x128xf32>
    %c0_21 = arith.constant 0 : index
    %c0_22 = arith.constant 0 : index
    %20 = vector.load %arg10[%c0_21, %c0_22] : memref<1x128xf32, #tpu.memory_space<vmem>>, vector<1x128xf32>
    %21 = vector.broadcast %20 : vector<1x128xf32> to vector<8x128xf32>
    %22 = arith.addf %19, %21 : vector<8x128xf32>
    %23 = vector.shape_cast %12 : vector<8x128xf32> to vector<8x4x32xf32>
    %24 = tpu.transpose %23, [1, 0, 2] : vector<8x4x32xf32> -> vector<4x8x32xf32>
    %25 = arith.truncf %24 : vector<4x8x32xf32> to vector<4x8x32xbf16>
    %26 = vector.shape_cast %17 : vector<8x128xf32> to vector<8x4x32xf32>
    %27 = tpu.transpose %26, [1, 0, 2] : vector<8x4x32xf32> -> vector<4x8x32xf32>
    %28 = arith.truncf %27 : vector<4x8x32xf32> to vector<4x8x32xbf16>
    %29 = vector.shape_cast %22 : vector<8x128xf32> to vector<8x4x32xf32>
    %30 = tpu.transpose %29, [1, 0, 2] : vector<8x4x32xf32> -> vector<4x8x32xf32>
    %31 = arith.truncf %30 : vector<4x8x32xf32> to vector<4x8x32xbf16>
    %cst_23 = arith.constant dense<0.000000e+00> : vector<4x8x8xf32>
    %32 = tpu.matmul %25, %28, %cst_23 {dimension_numbers = #tpu.dot_dimension_numbers<[2], [2], [1], [1], [0, 0, 0, 1, 1, 1], [0], [0]>} : vector<4x8x32xbf16>, vector<4x8x32xbf16>, vector<4x8x8xf32> -> vector<4x8x8xf32>
    %cst_24 = arith.constant dense<0xFF800000> : vector<4x8xf32>
    %33 = vector.multi_reduction <maximumf>, %32, %cst_24 [2] : vector<4x8x8xf32> to vector<4x8xf32>
    %34 = vector.shape_cast %33 : vector<4x8xf32> to vector<4x8x1xf32>
    %35 = vector.broadcast %34 : vector<4x8x1xf32> to vector<4x8x8xf32>
    %36 = arith.subf %32, %35 : vector<4x8x8xf32>
    %37 = math.exp %36 : vector<4x8x8xf32>
    %cst_25 = arith.constant dense<0.000000e+00> : vector<4x8xf32>
    %38 = vector.multi_reduction <add>, %37, %cst_25 [2] : vector<4x8x8xf32> to vector<4x8xf32>
    %39 = vector.shape_cast %38 : vector<4x8xf32> to vector<4x8x1xf32>
    %40 = tpu.reciprocal %39 {approx = true} : vector<4x8x1xf32> -> vector<4x8x1xf32>
    %41 = vector.broadcast %40 : vector<4x8x1xf32> to vector<4x8x8xf32>
    %42 = arith.mulf %37, %41 : vector<4x8x8xf32>
    %43 = arith.truncf %42 : vector<4x8x8xf32> to vector<4x8x8xbf16>
    %cst_26 = arith.constant dense<0.000000e+00> : vector<4x8x32xf32>
    %44 = tpu.matmul %43, %31, %cst_26 {dimension_numbers = #tpu.dot_dimension_numbers<[2], [1], [1], [2], [0, 0, 0, 1, 1, 2], [0], [0]>} : vector<4x8x8xbf16>, vector<4x8x32xbf16>, vector<4x8x32xf32> -> vector<4x8x32xf32>
    %45 = tpu.transpose %44, [1, 0, 2] : vector<4x8x32xf32> -> vector<8x4x32xf32>
    %46 = vector.shape_cast %45 : vector<8x4x32xf32> to vector<8x128xf32>
    %47 = arith.truncf %46 : vector<8x128xf32> to vector<8x128xbf16>
    %c0_27 = arith.constant 0 : index
    %c0_28 = arith.constant 0 : index
    %48 = vector.load %arg11[%c0_27, %c0_28] : memref<128x128xbf16, #tpu.memory_space<vmem>>, vector<128x128xbf16>
    %cst_29 = arith.constant dense<0.000000e+00> : vector<8x128xf32>
    %49 = tpu.matmul %47, %48, %cst_29 {dimension_numbers = #tpu.dot_dimension_numbers<[1], [0], [0], [1], [0, 0, 1, 1], [], []>} : vector<8x128xbf16>, vector<128x128xbf16>, vector<8x128xf32> -> vector<8x128xf32>
    %c0_30 = arith.constant 0 : index
    %c0_31 = arith.constant 0 : index
    %50 = vector.load %arg12[%c0_30, %c0_31] : memref<1x128xf32, #tpu.memory_space<vmem>>, vector<1x128xf32>
    %51 = vector.broadcast %50 : vector<1x128xf32> to vector<8x128xf32>
    %52 = arith.addf %49, %51 : vector<8x128xf32>
    %c0_32 = arith.constant 0 : index
    %c0_33 = arith.constant 0 : index
    %c0_34 = arith.constant 0 : index
    %53 = vector.load %arg13[%c0_32, %c0_33, %c0_34] : memref<1x8x128xf32, #tpu.memory_space<vmem>>, vector<1x8x128xf32>
    %54 = vector.shape_cast %53 : vector<1x8x128xf32> to vector<8x128xf32>
    %55 = vector.shape_cast %52 : vector<8x128xf32> to vector<1x8x128xf32>
    tpu.vector_store %arg13[%c0_32, %c0_33, %c0_34], %55 {strides = array<i32>} : memref<1x8x128xf32, #tpu.memory_space<vmem>>, vector<1x8x128xf32>,
    return
  }
  func.func @transform_0(%arg0: i32, %arg1: i32) -> (i32, i32, i32) {
    %c0_i32 = arith.constant 0 : i32
    %c0_i32_0 = arith.constant 0 : i32
    return %arg0, %arg1, %c0_i32 : i32, i32, i32
  }
  func.func @transform_1(%arg0: i32, %arg1: i32) -> (i32, i32, i32) {
    %c0_i32 = arith.constant 0 : i32
    %c0_i32_0 = arith.constant 0 : i32
    %c0_i32_1 = arith.constant 0 : i32
    return %arg0, %c0_i32, %c0_i32_0 : i32, i32, i32
  }
  func.func @transform_2(%arg0: i32, %arg1: i32) -> (i32, i32, i32) {
    %c0_i32 = arith.constant 0 : i32
    %c0_i32_0 = arith.constant 0 : i32
    %c0_i32_1 = arith.constant 0 : i32
    return %arg0, %c0_i32, %c0_i32_0 : i32, i32, i32
  }
  func.func @transform_3(%arg0: i32, %arg1: i32) -> (i32, i32) {
    %c0_i32 = arith.constant 0 : i32
    %c0_i32_0 = arith.constant 0 : i32
    %c0_i32_1 = arith.constant 0 : i32
    return %c0_i32, %c0_i32_0 : i32, i32
  }
  func.func @transform_4(%arg0: i32, %arg1: i32) -> (i32, i32) {
    %c0_i32 = arith.constant 0 : i32
    %c0_i32_0 = arith.constant 0 : i32
    %c0_i32_1 = arith.constant 0 : i32
    return %c0_i32, %c0_i32_0 : i32, i32
  }
  func.func @transform_5(%arg0: i32, %arg1: i32) -> (i32, i32) {
    %c0_i32 = arith.constant 0 : i32
    %c0_i32_0 = arith.constant 0 : i32
    %c0_i32_1 = arith.constant 0 : i32
    return %c0_i32, %c0_i32_0 : i32, i32
  }
  func.func @transform_6(%arg0: i32, %arg1: i32) -> (i32, i32) {
    %c0_i32 = arith.constant 0 : i32
    %c0_i32_0 = arith.constant 0 : i32
    %c0_i32_1 = arith.constant 0 : i32
    return %c0_i32, %c0_i32_0 : i32, i32
  }
  func.func @transform_7(%arg0: i32, %arg1: i32) -> (i32, i32) {
    %c0_i32 = arith.constant 0 : i32
    %c0_i32_0 = arith.constant 0 : i32
    %c0_i32_1 = arith.constant 0 : i32
    return %c0_i32, %c0_i32_0 : i32, i32
  }
  func.func @transform_8(%arg0: i32, %arg1: i32) -> (i32, i32) {
    %c0_i32 = arith.constant 0 : i32
    %c0_i32_0 = arith.constant 0 : i32
    %c0_i32_1 = arith.constant 0 : i32
    return %c0_i32, %c0_i32_0 : i32, i32
  }
  func.func @transform_9(%arg0: i32, %arg1: i32) -> (i32, i32) {
    %c0_i32 = arith.constant 0 : i32
    %c0_i32_0 = arith.constant 0 : i32
    %c0_i32_1 = arith.constant 0 : i32
    return %c0_i32, %c0_i32_0 : i32, i32
  }
  func.func @transform_10(%arg0: i32, %arg1: i32) -> (i32, i32) {
    %c0_i32 = arith.constant 0 : i32
    %c0_i32_0 = arith.constant 0 : i32
    %c0_i32_1 = arith.constant 0 : i32
    return %c0_i32, %c0_i32_0 : i32, i32
  }
  func.func @transform_11(%arg0: i32, %arg1: i32) -> (i32, i32, i32) {
    %c0_i32 = arith.constant 0 : i32
    %c0_i32_0 = arith.constant 0 : i32
    return %arg0, %arg1, %c0_i32 : i32, i32, i32
  }
}

</mosaic_0001>

<llo_original>
// kernel: tpu_custom_call.1
$region0: #{tpu_custom_call.1}
  #allocation0 [shape = 'u32[]', space=smem, size = 0x4, offset = 0x4, fixed_abs, tag = 'smem constant byte address 0x4 - core index']
  #allocation1 [shape = 'u32[144,128]{1,0:T(1,128)}', space=vmem, size = 0x12000, scoped, tag = 'internal scratch']
  %s0 = inlined_call_operand.hbm [shape: bf16[2,8,128], index: 0, kind: input, shape index: {}]
  %s1 = inlined_call_operand.hbm [shape: bf16[2,8,128], index: 1, kind: input, shape index: {}]
  %s2 = inlined_call_operand.hbm [shape: bf16[2,8,128], index: 2, kind: input, shape index: {}]
  %s3 = inlined_call_operand.hbm [shape: bf16[128,128], index: 3, kind: input, shape index: {}]
  %s4 = inlined_call_operand.vmem [shape: f32[1,128], index: 4, kind: input, shape index: {}]
  %s5 = inlined_call_operand.hbm [shape: bf16[128,128], index: 5, kind: input, shape index: {}]
  %s6 = inlined_call_operand.vmem [shape: f32[1,128], index: 6, kind: input, shape index: {}]
  %s7 = inlined_call_operand.hbm [shape: bf16[128,128], index: 7, kind: input, shape index: {}]
  %s8 = inlined_call_operand.vmem [shape: f32[1,128], index: 8, kind: input, shape index: {}]
  %s9 = inlined_call_operand.hbm [shape: bf16[128,128], index: 9, kind: input, shape index: {}]
  %s10 = inlined_call_operand.vmem [shape: f32[1,128], index: 10, kind: input, shape index: {}]
  %s11 = inlined_call_operand.hbm [shape: f32[2,8,128], index: 11, kind: output, shape index: {}]
  %s12 = sld [smem:[#allocation0]]
  $region105: #{tpu_custom_call.1} parent=0
    _
  %s14 = ssub.s32 1, %s12
  %s15 = scalar_select 0, %s14, %s12
  $region1: #{tpu_custom_call.1} parent=0
    #allocation2 [shape = 'u8[4096]{0}', space=vmem, size = 0x1000, scoped, tag = 'input window, operand 0']
    #allocation3 [shape = 's32[2]{0}', space=sflag, size = 0x8, scoped, tag = 'scoped memory for tpu_custom_call.1']
    #allocation4 [shape = 's32[2]{0}', space=sflag, size = 0x8, scoped, tag = 'scoped memory for tpu_custom_call.1']
    #allocation5 [shape = 'u8[4096]{0}', space=vmem, size = 0x1000, scoped, tag = 'input window, operand 1']
    #allocation6 [shape = 's32[2]{0}', space=sflag, size = 0x8, scoped, tag = 'scoped memory for tpu_custom_call.1']
    #allocation7 [shape = 'u8[4096]{0}', space=vmem, size = 0x1000, scoped, tag = 'input window, operand 2']
    #allocation8 [shape = 'u8[32768]{0}', space=vmem, size = 0x8000, scoped, tag = 'input window, operand 3, single buffered']
    #allocation9 [shape = 's32[1]{0}', space=sflag, size = 0x4, scoped, tag = 'scoped memory for tpu_custom_call.1']
    #allocation10 [shape = 'u8[32768]{0}', space=vmem, size = 0x8000, scoped, tag = 'input window, operand 5, single buffered']
    #allocation11 [shape = 'u8[32768]{0}', space=vmem, size = 0x8000, scoped, tag = 'input window, operand 7, single buffered']
    #allocation12 [shape = 's32[1]{0}', space=sflag, size = 0x4, scoped, tag = 'scoped memory for tpu_custom_call.1']
    #allocation13 [shape = 'u8[32768]{0}', space=vmem, size = 0x8000, scoped, tag = 'input window, operand 9, single buffered']
    #allocation14 [shape = 'u8[8192]{0}', space=vmem, size = 0x2000, scoped, tag = 'output window, operand 0']
    %16 = vsyncpa [#allocation3], 0
    %s17 = scalar_lea.sflag [#allocation3], 1
    %18 = vsyncpa %s17, 0
    %19 = vsyncpa [#allocation6], 0
    %s20 = scalar_lea.sflag [#allocation6], 1
    %21 = vsyncpa %s20, 0
    %22 = vsyncpa [#allocation9], 0
    %23 = vsyncpa [#allocation12], 0
    %24 = vsyncpa [#allocation4], 0
    %s25 = scalar_lea.sflag [#allocation4], 1
    %26 = vsyncpa %s25, 0
    loop: start=0, step=1, limit=4
    $region2: #{tpu_custom_call.1} parent=1 // loop_pre_header
      _
    $region3: #{tpu_custom_call.1} parent=1 // loop_header
      %s28 = sphi 0, %s32
      %p29 = scmp.ge.s32.totalorder %s28, 4
      %s35 = sphi 0, %s47
      %s36 = sphi 0, %s43
      %s37 = sphi 0, %s35
      %s38 = sphi 0, %s36
      %s39 = sphi 0, %s37
      %s40 = sphi 0, %s38
      %s52 = sphi 0, %s54
      %s55 = sphi 0, %s52
      %s56 = sphi 0, %s55
      %s72 = sphi 0, %s56
      %s78 = sphi 0, %s80
      %s81 = sphi 0, %s78
      %s82 = sphi 0, %s81
      %s98 = sphi 0, %s82
      %s104 = sphi 0, %s106
      %s107 = sphi 0, %s104
      %s108 = sphi 0, %s107
      %s124 = sphi 0, %s108
      %s128 = sphi 0, %s128
      %s130 = sphi 0, %s128
      %s131 = sphi 0, %s130
      %s145 = sphi 0, %s131
      %s149 = sphi 0, %s149
      %s151 = sphi 0, %s149
      %s152 = sphi 0, %s151
      %s166 = sphi 0, %s152
      %s170 = sphi 0, %s170
      %s172 = sphi 0, %s170
      %s173 = sphi 0, %s172
      %s187 = sphi 0, %s173
      %s191 = sphi 0, %s191
      %s193 = sphi 0, %s191
      %s194 = sphi 0, %s193
      %s208 = sphi 0, %s194
      %s212 = sphi 0, %s212
      %s214 = sphi 0, %s212
      %s215 = sphi 0, %s214
      %s229 = sphi 0, %s215
      %s233 = sphi 0, %s233
      %s235 = sphi 0, %s233
      %s236 = sphi 0, %s235
      %s250 = sphi 0, %s236
      %s254 = sphi 0, %s254
      %s256 = sphi 0, %s254
      %s257 = sphi 0, %s256
      %s271 = sphi 0, %s257
      %s275 = sphi 0, %s275
      %s277 = sphi 0, %s275
      %s278 = sphi 0, %s277
      %s292 = sphi 0, %s278
      %s300 = sphi 0, %s302
      %s303 = sphi 0, %s300
      %s304 = sphi 0, %s303
      %s320 = sphi 0, %s304
    $region4: #{tpu_custom_call.1} parent=1 // loop_header_branch
      %31 = sbr.rel (%p29) target = $region8
    $region5: #{tpu_custom_call.1} parent=1 // loop_body
      %s33 = ssub.s32 %s28, 1
      %s34 = ssub.s32 %s28, 2
      %s41 = sadd.s32 1, %s36
      %p42 = scmp.ge.s32.totalorder %s41, 1
      %s43 = scalar_select %p42, 0, %s41
      %s44 = sadd.s32 1, %s35
      %s45 = scalar_select %p42, %s44, %s35
      %p46 = scmp.ge.s32.totalorder %s45, 2
      %s47 = scalar_select %p46, 0, %s45
      %s48 = ssub.s32 %s35, %s47
      %s49 = ssub.s32 %s36, %s43
      %s50 = sor.u32 %s48, %s49
      %p51 = scmp.eq.s32.totalorder %s50, 0
      %s53 = sadd.s32 %s52, 1
      %s54 = scalar_select %p51, %s52, %s53
      %p57 = pneg %p51
      %p58 = scmp.eq.s32.totalorder %s28, 1
      %p59 = por %p57, %p58
      %p60 = scmp.ne.s32.totalorder %s52, %s55
      %p61 = scmp.eq.s32.totalorder %s28, 0
      %p62 = por %p60, %p61
      %p63 = scmp.ne.s32.totalorder %s52, %s55
      %p64 = scmp.eq.s32.totalorder %s33, 1
      %p65 = por %p63, %p64
      %p66 = scmp.ne.s32.totalorder %s55, %s56
      %p67 = scmp.eq.s32.totalorder %s33, 0
      %p68 = por %p66, %p67
      %p69 = scmp.ne.s32.totalorder %s55, %s56
      %p70 = scmp.eq.s32.totalorder %s34, 1
      %p71 = por %p69, %p70
      %p73 = scmp.ne.s32.totalorder %s56, %s72
      %p74 = scmp.eq.s32.totalorder %s34, 0
      %p75 = por %p73, %p74
      %s76 = ssub.s32 %s35, %s47
      %p77 = scmp.eq.s32.totalorder %s76, 0
      %s79 = sadd.s32 %s78, 1
      %s80 = scalar_select %p77, %s78, %s79
      %p83 = pneg %p77
      %p84 = scmp.eq.s32.totalorder %s28, 1
      %p85 = por %p83, %p84
      %p86 = scmp.ne.s32.totalorder %s78, %s81
      %p87 = scmp.eq.s32.totalorder %s28, 0
      %p88 = por %p86, %p87
      %p89 = scmp.ne.s32.totalorder %s78, %s81
      %p90 = scmp.eq.s32.totalorder %s33, 1
      %p91 = por %p89, %p90
      %p92 = scmp.ne.s32.totalorder %s81, %s82
      %p93 = scmp.eq.s32.totalorder %s33, 0
      %p94 = por %p92, %p93
      %p95 = scmp.ne.s32.totalorder %s81, %s82
      %p96 = scmp.eq.s32.totalorder %s34, 1
      %p97 = por %p95, %p96
      %p99 = scmp.ne.s32.totalorder %s82, %s98
      %p100 = scmp.eq.s32.totalorder %s34, 0
      %p101 = por %p99, %p100
      %s102 = ssub.s32 %s35, %s47
      %p103 = scmp.eq.s32.totalorder %s102, 0
      %s105 = sadd.s32 %s104, 1
      %s106 = scalar_select %p103, %s104, %s105
      %p109 = pneg %p103
      %p110 = scmp.eq.s32.totalorder %s28, 1
      %p111 = por %p109, %p110
      %p112 = scmp.ne.s32.totalorder %s104, %s107
      %p113 = scmp.eq.s32.totalorder %s28, 0
      %p114 = por %p112, %p113
      %p115 = scmp.ne.s32.totalorder %s104, %s107
      %p116 = scmp.eq.s32.totalorder %s33, 1
      %p117 = por %p115, %p116
      %p118 = scmp.ne.s32.totalorder %s107, %s108
      %p119 = scmp.eq.s32.totalorder %s33, 0
      %p120 = por %p118, %p119
      %p121 = scmp.ne.s32.totalorder %s107, %s108
      %p122 = scmp.eq.s32.totalorder %s34, 1
      %p123 = por %p121, %p122
      %p125 = scmp.ne.s32.totalorder %s108, %s124
      %p126 = scmp.eq.s32.totalorder %s34, 0
      %p127 = por %p125, %p126
      %s129 = sadd.s32 %s128, 1
      %p132 = scmp.eq.s32.totalorder %s28, 1
      %p133 = scmp.ne.s32.totalorder %s128, %s130
      %p134 = scmp.eq.s32.totalorder %s28, 0
      %p135 = por %p133, %p134
      %p136 = scmp.ne.s32.totalorder %s128, %s130
      %p137 = scmp.eq.s32.totalorder %s33, 1
      %p138 = por %p136, %p137
      %p139 = scmp.ne.s32.totalorder %s130, %s131
      %p140 = scmp.eq.s32.totalorder %s33, 0
      %p141 = por %p139, %p140
      %p142 = scmp.ne.s32.totalorder %s130, %s131
      %p143 = scmp.eq.s32.totalorder %s34, 1
      %p144 = por %p142, %p143
      %p146 = scmp.ne.s32.totalorder %s131, %s145
      %p147 = scmp.eq.s32.totalorder %s34, 0
      %p148 = por %p146, %p147
      %s150 = sadd.s32 %s149, 1
      %p153 = scmp.eq.s32.totalorder %s28, 1
      %p154 = scmp.ne.s32.totalorder %s149, %s151
      %p155 = scmp.eq.s32.totalorder %s28, 0
      %p156 = por %p154, %p155
      %p157 = scmp.ne.s32.totalorder %s149, %s151
      %p158 = scmp.eq.s32.totalorder %s33, 1
      %p159 = por %p157, %p158
      %p160 = scmp.ne.s32.totalorder %s151, %s152
      %p161 = scmp.eq.s32.totalorder %s33, 0
      %p162 = por %p160, %p161
      %p163 = scmp.ne.s32.totalorder %s151, %s152
      %p164 = scmp.eq.s32.totalorder %s34, 1
      %p165 = por %p163, %p164
      %p167 = scmp.ne.s32.totalorder %s152, %s166
      %p168 = scmp.eq.s32.totalorder %s34, 0
      %p169 = por %p167, %p168
      %s171 = sadd.s32 %s170, 1
      %p174 = scmp.eq.s32.totalorder %s28, 1
      %p175 = scmp.ne.s32.totalorder %s170, %s172
      %p176 = scmp.eq.s32.totalorder %s28, 0
      %p177 = por %p175, %p176
      %p178 = scmp.ne.s32.totalorder %s170, %s172
      %p179 = scmp.eq.s32.totalorder %s33, 1
      %p180 = por %p178, %p179
      %p181 = scmp.ne.s32.totalorder %s172, %s173
      %p182 = scmp.eq.s32.totalorder %s33, 0
      %p183 = por %p181, %p182
      %p184 = scmp.ne.s32.totalorder %s172, %s173
      %p185 = scmp.eq.s32.totalorder %s34, 1
      %p186 = por %p184, %p185
      %p188 = scmp.ne.s32.totalorder %s173, %s187
      %p189 = scmp.eq.s32.totalorder %s34, 0
      %p190 = por %p188, %p189
      %s192 = sadd.s32 %s191, 1
      %p195 = scmp.eq.s32.totalorder %s28, 1
      %p196 = scmp.ne.s32.totalorder %s191, %s193
      %p197 = scmp.eq.s32.totalorder %s28, 0
      %p198 = por %p196, %p197
      %p199 = scmp.ne.s32.totalorder %s191, %s193
      %p200 = scmp.eq.s32.totalorder %s33, 1
      %p201 = por %p199, %p200
      %p202 = scmp.ne.s32.totalorder %s193, %s194
      %p203 = scmp.eq.s32.totalorder %s33, 0
      %p204 = por %p202, %p203
      %p205 = scmp.ne.s32.totalorder %s193, %s194
      %p206 = scmp.eq.s32.totalorder %s34, 1
      %p207 = por %p205, %p206
      %p209 = scmp.ne.s32.totalorder %s194, %s208
      %p210 = scmp.eq.s32.totalorder %s34, 0
      %p211 = por %p209, %p210
      %s213 = sadd.s32 %s212, 1
      %p216 = scmp.eq.s32.totalorder %s28, 1
      %p217 = scmp.ne.s32.totalorder %s212, %s214
      %p218 = scmp.eq.s32.totalorder %s28, 0
      %p219 = por %p217, %p218
      %p220 = scmp.ne.s32.totalorder %s212, %s214
      %p221 = scmp.eq.s32.totalorder %s33, 1
      %p222 = por %p220, %p221
      %p223 = scmp.ne.s32.totalorder %s214, %s215
      %p224 = scmp.eq.s32.totalorder %s33, 0
      %p225 = por %p223, %p224
      %p226 = scmp.ne.s32.totalorder %s214, %s215
      %p227 = scmp.eq.s32.totalorder %s34, 1
      %p228 = por %p226, %p227
      %p230 = scmp.ne.s32.totalorder %s215, %s229
      %p231 = scmp.eq.s32.totalorder %s34, 0
      %p232 = por %p230, %p231
      %s234 = sadd.s32 %s233, 1
      %p237 = scmp.eq.s32.totalorder %s28, 1
      %p238 = scmp.ne.s32.totalorder %s233, %s235
      %p239 = scmp.eq.s32.totalorder %s28, 0
      %p240 = por %p238, %p239
      %p241 = scmp.ne.s32.totalorder %s233, %s235
      %p242 = scmp.eq.s32.totalorder %s33, 1
      %p243 = por %p241, %p242
      %p244 = scmp.ne.s32.totalorder %s235, %s236
      %p245 = scmp.eq.s32.totalorder %s33, 0
      %p246 = por %p244, %p245
      %p247 = scmp.ne.s32.totalorder %s235, %s236
      %p248 = scmp.eq.s32.totalorder %s34, 1
      %p249 = por %p247, %p248
      %p251 = scmp.ne.s32.totalorder %s236, %s250
      %p252 = scmp.eq.s32.totalorder %s34, 0
      %p253 = por %p251, %p252
      %s255 = sadd.s32 %s254, 1
      %p258 = scmp.eq.s32.totalorder %s28, 1
      %p259 = scmp.ne.s32.totalorder %s254, %s256
      %p260 = scmp.eq.s32.totalorder %s28, 0
      %p261 = por %p259, %p260
      %p262 = scmp.ne.s32.totalorder %s254, %s256
      %p263 = scmp.eq.s32.totalorder %s33, 1
      %p264 = por %p262, %p263
      %p265 = scmp.ne.s32.totalorder %s256, %s257
      %p266 = scmp.eq.s32.totalorder %s33, 0
      %p267 = por %p265, %p266
      %p268 = scmp.ne.s32.totalorder %s256, %s257
      %p269 = scmp.eq.s32.totalorder %s34, 1
      %p270 = por %p268, %p269
      %p272 = scmp.ne.s32.totalorder %s257, %s271
      %p273 = scmp.eq.s32.totalorder %s34, 0
      %p274 = por %p272, %p273
      %s276 = sadd.s32 %s275, 1
      %p279 = scmp.eq.s32.totalorder %s28, 1
      %p280 = scmp.ne.s32.totalorder %s275, %s277
      %p281 = scmp.eq.s32.totalorder %s28, 0
      %p282 = por %p280, %p281
      %p283 = scmp.ne.s32.totalorder %s275, %s277
      %p284 = scmp.eq.s32.totalorder %s33, 1
      %p285 = por %p283, %p284
      %p286 = scmp.ne.s32.totalorder %s277, %s278
      %p287 = scmp.eq.s32.totalorder %s33, 0
      %p288 = por %p286, %p287
      %p289 = scmp.ne.s32.totalorder %s277, %s278
      %p290 = scmp.eq.s32.totalorder %s34, 1
      %p291 = por %p289, %p290
      %p293 = scmp.ne.s32.totalorder %s278, %s292
      %p294 = scmp.eq.s32.totalorder %s34, 0
      %p295 = por %p293, %p294
      %s296 = ssub.s32 %s35, %s47
      %s297 = ssub.s32 %s36, %s43
      %s298 = sor.u32 %s296, %s297
      %p299 = scmp.eq.s32.totalorder %s298, 0
      %s301 = sadd.s32 %s300, 1
      %s302 = scalar_select %p299, %s300, %s301
      %p305 = pneg %p299
      %p306 = scmp.eq.s32.totalorder %s28, 1
      %p307 = por %p305, %p306
      %p308 = scmp.ne.s32.totalorder %s300, %s303
      %p309 = scmp.eq.s32.totalorder %s28, 0
      %p310 = por %p308, %p309
      %p311 = scmp.ne.s32.totalorder %s300, %s303
      %p312 = scmp.eq.s32.totalorder %s33, 1
      %p313 = por %p311, %p312
      %p314 = scmp.ne.s32.totalorder %s303, %s304
      %p315 = scmp.eq.s32.totalorder %s33, 0
      %p316 = por %p314, %p315
      %p317 = scmp.ne.s32.totalorder %s303, %s304
      %p318 = scmp.eq.s32.totalorder %s34, 1
      %p319 = por %p317, %p318
      %p321 = scmp.ne.s32.totalorder %s304, %s320
      %p322 = scmp.eq.s32.totalorder %s34, 0
      %p323 = por %p321, %p322
      %p324 = scmp.le.s32.totalorder 1, %s28
      %p325 = scmp.lt.s32.totalorder %s28, 3
      %p326 = pnand %p324, %p325
      %p327 = pneg %p326
      // Predicated region
      $region9: #{tpu_custom_call.1} parent=5 // pred_check
        _
      $region10: #{tpu_custom_call.1} parent=5 // pred_check_branch
        %329 = sbr.rel (%p326) target = $region12
      $region11: #{tpu_custom_call.1} parent=5 // pred_region
        %s330 = ssub.s32 %s28, 1
        // Predicated region
        $region13: #{tpu_custom_call.1} parent=11 // pred_check
          %p331 = pneg %p141
        $region14: #{tpu_custom_call.1} parent=11 // pred_check_branch
          %333 = sbr.rel (%p331) target = $region16
        $region15: #{tpu_custom_call.1} parent=11 // pred_region
          %s335 = ssub.s32 1024, 1024
          %336 = vsyncadd [#allocation9], %s335
          %s337 = sshll.u32 [#allocation8], 4
          %s338 = int_to_ptr.vmem [resolvable:$true] %s337
          %343 = dma.hbm_to_vmem [thread:$0]  %s3, 1024, %s338, [#allocation9], 64, 64, 4
        $region16: #{tpu_custom_call.1} parent=11 // pred_fallthru
          _
        // Predicated region
        $region17: #{tpu_custom_call.1} parent=11 // pred_check
          %p344 = pneg %p162
        $region18: #{tpu_custom_call.1} parent=11 // pred_check_branch
          %346 = sbr.rel (%p344) target = $region20
        $region19: #{tpu_custom_call.1} parent=11 // pred_region
          _
        $region20: #{tpu_custom_call.1} parent=11 // pred_fallthru
          _
        // Predicated region
        $region21: #{tpu_custom_call.1} parent=11 // pred_check
          %p347 = pneg %p183
        $region22: #{tpu_custom_call.1} parent=11 // pred_check_branch
          %349 = sbr.rel (%p347) target = $region24
        $region23: #{tpu_custom_call.1} parent=11 // pred_region
          %s351 = ssub.s32 1024, 1024
          %352 = vsyncadd [#allocation9], %s351
          %s353 = sshll.u32 [#allocation10], 4
          %s354 = int_to_ptr.vmem [resolvable:$true] %s353
          %359 = dma.hbm_to_vmem [thread:$0]  %s5, 1024, %s354, [#allocation9], 64, 64, 4
        $region24: #{tpu_custom_call.1} parent=11 // pred_fallthru
          _
        // Predicated region
        $region25: #{tpu_custom_call.1} parent=11 // pred_check
          %p360 = pneg %p204
        $region26: #{tpu_custom_call.1} parent=11 // pred_check_branch
          %362 = sbr.rel (%p360) target = $region28
        $region27: #{tpu_custom_call.1} parent=11 // pred_region
          _
        $region28: #{tpu_custom_call.1} parent=11 // pred_fallthru
          _
        // Predicated region
        $region29: #{tpu_custom_call.1} parent=11 // pred_check
          %p363 = pneg %p225
        $region30: #{tpu_custom_call.1} parent=11 // pred_check_branch
          %365 = sbr.rel (%p363) target = $region32
        $region31: #{tpu_custom_call.1} parent=11 // pred_region
          %s367 = ssub.s32 1024, 1024
          %368 = vsyncadd [#allocation12], %s367
          %s369 = sshll.u32 [#allocation11], 4
          %s370 = int_to_ptr.vmem [resolvable:$true] %s369
          %375 = dma.hbm_to_vmem [thread:$0]  %s7, 1024, %s370, [#allocation12], 64, 64, 4
        $region32: #{tpu_custom_call.1} parent=11 // pred_fallthru
          _
        // Predicated region
        $region33: #{tpu_custom_call.1} parent=11 // pred_check
          %p376 = pneg %p246
        $region34: #{tpu_custom_call.1} parent=11 // pred_check_branch
          %378 = sbr.rel (%p376) target = $region36
        $region35: #{tpu_custom_call.1} parent=11 // pred_region
          _
        $region36: #{tpu_custom_call.1} parent=11 // pred_fallthru
          _
        // Predicated region
        $region37: #{tpu_custom_call.1} parent=11 // pred_check
          %p379 = pneg %p267
        $region38: #{tpu_custom_call.1} parent=11 // pred_check_branch
          %381 = sbr.rel (%p379) target = $region40
        $region39: #{tpu_custom_call.1} parent=11 // pred_region
          %s383 = ssub.s32 1024, 1024
          %384 = vsyncadd [#allocation12], %s383
          %s385 = sshll.u32 [#allocation13], 4
          %s386 = int_to_ptr.vmem [resolvable:$true] %s385
          %391 = dma.hbm_to_vmem [thread:$0]  %s9, 1024, %s386, [#allocation12], 64, 64, 4
        $region40: #{tpu_custom_call.1} parent=11 // pred_fallthru
          _
        // Predicated region
        $region41: #{tpu_custom_call.1} parent=11 // pred_check
          %p392 = pneg %p288
        $region42: #{tpu_custom_call.1} parent=11 // pred_check_branch
          %394 = sbr.rel (%p392) target = $region44
        $region43: #{tpu_custom_call.1} parent=11 // pred_region
          _
        $region44: #{tpu_custom_call.1} parent=11 // pred_fallthru
          _
      $region12: #{tpu_custom_call.1} parent=5 // pred_fallthru
        _
      %p395 = scmp.lt.s32.totalorder %s28, 2
      // Predicated region
      $region45: #{tpu_custom_call.1} parent=5 // pred_check
        %p396 = pneg %p395
      $region46: #{tpu_custom_call.1} parent=5 // pred_check_branch
        %398 = sbr.rel (%p396) target = $region48
      $region47: #{tpu_custom_call.1} parent=5 // pred_region
        // Predicated region
        $region49: #{tpu_custom_call.1} parent=47 // pred_check
          %p399 = pneg %p62
        $region50: #{tpu_custom_call.1} parent=47 // pred_check_branch
          %401 = sbr.rel (%p399) target = $region52
        $region51: #{tpu_custom_call.1} parent=47 // pred_region
          %s402 = sand.u32 %s52, 1
          %s403 = scalar_lea.sflag [#allocation3], %s402
          %s404 = sand.u32 %s52, 1
          %s405 = smul.addr %s404, 4
          %s406 = scalar_lea.vmem [#allocation2], %s405
          %s408 = ssub.s32 64, 64
          %409 = vsyncadd %s403, %s408
          %s410 = sadd.s32 %s36, %s35
          %s411 = smul.addr %s410, 64
          %s412 = scalar_lea.hbm %s0, %s411
          %s414 = sshll.u32 %s406, 4
          %s415 = int_to_ptr.vmem [resolvable:$true] %s414
          %417 = dma.hbm_to_vmem [thread:$0]  %s412, 64, %s415, %s403
        $region52: #{tpu_custom_call.1} parent=47 // pred_fallthru
          _
        // Predicated region
        $region53: #{tpu_custom_call.1} parent=47 // pred_check
          %p418 = pneg %p88
        $region54: #{tpu_custom_call.1} parent=47 // pred_check_branch
          %420 = sbr.rel (%p418) target = $region56
        $region55: #{tpu_custom_call.1} parent=47 // pred_region
          %s421 = sand.u32 %s28, 1
          %s422 = scalar_lea.sflag [#allocation6], %s421
          %s423 = sand.u32 %s78, 1
          %s424 = smul.addr %s423, 4
          %s425 = scalar_lea.vmem [#allocation5], %s424
          %s427 = ssub.s32 64, 64
          %428 = vsyncadd %s422, %s427
          %s429 = smul.addr %s35, 64
          %s430 = scalar_lea.hbm %s1, %s429
          %s432 = sshll.u32 %s425, 4
          %s433 = int_to_ptr.vmem [resolvable:$true] %s432
          %435 = dma.hbm_to_vmem [thread:$0]  %s430, 64, %s433, %s422
        $region56: #{tpu_custom_call.1} parent=47 // pred_fallthru
          _
        // Predicated region
        $region57: #{tpu_custom_call.1} parent=47 // pred_check
          %p436 = pneg %p114
        $region58: #{tpu_custom_call.1} parent=47 // pred_check_branch
          %438 = sbr.rel (%p436) target = $region60
        $region59: #{tpu_custom_call.1} parent=47 // pred_region
          %s439 = sand.u32 %s28, 1
          %s440 = scalar_lea.sflag [#allocation6], %s439
          %s441 = sand.u32 %s104, 1
          %s442 = smul.addr %s441, 4
          %s443 = scalar_lea.vmem [#allocation7], %s442
          %s445 = ssub.s32 64, 64
          %446 = vsyncadd %s440, %s445
          %s447 = smul.addr %s35, 64
          %s448 = scalar_lea.hbm %s2, %s447
          %s450 = sshll.u32 %s443, 4
          %s451 = int_to_ptr.vmem [resolvable:$true] %s450
          %453 = dma.hbm_to_vmem [thread:$0]  %s448, 64, %s451, %s440
        $region60: #{tpu_custom_call.1} parent=47 // pred_fallthru
          _
      $region48: #{tpu_custom_call.1} parent=5 // pred_fallthru
        _
      %p454 = scmp.le.s32.totalorder 1, %s28
      %p455 = scmp.lt.s32.totalorder %s28, 3
      %p456 = pnand %p454, %p455
      %p457 = pneg %p456
      // Predicated region
      $region61: #{tpu_custom_call.1} parent=5 // pred_check
        _
      $region62: #{tpu_custom_call.1} parent=5 // pred_check_branch
        %459 = sbr.rel (%p456) target = $region64
      $region63: #{tpu_custom_call.1} parent=5 // pred_region
        %s460 = ssub.s32 %s28, 1
        %s461 = sand.u32 %s55, 1
        %s462 = scalar_lea.sflag [#allocation3], %s461
        %s463 = sand.u32 %s55, 1
        %s464 = smul.addr %s463, 4
        %s465 = scalar_lea.vmem [#allocation2], %s464
        // Predicated region
        $region65: #{tpu_custom_call.1} parent=63 // pred_check
          %p466 = pneg %p68
        $region66: #{tpu_custom_call.1} parent=63 // pred_check_branch
          %468 = sbr.rel (%p466) target = $region68
        $region67: #{tpu_custom_call.1} parent=63 // pred_region
          %469 = dma.done %s462, 64
        $region68: #{tpu_custom_call.1} parent=63 // pred_fallthru
          _
        %s470 = sand.u32 %s33, 1
        %s471 = scalar_lea.sflag [#allocation6], %s470
        %s472 = sand.u32 %s81, 1
        %s473 = smul.addr %s472, 4
        %s474 = scalar_lea.vmem [#allocation5], %s473
        // Predicated region
        $region69: #{tpu_custom_call.1} parent=63 // pred_check
          %p475 = pneg %p94
        $region70: #{tpu_custom_call.1} parent=63 // pred_check_branch
          %477 = sbr.rel (%p475) target = $region72
        $region71: #{tpu_custom_call.1} parent=63 // pred_region
          %478 = dma.done %s471, 64
        $region72: #{tpu_custom_call.1} parent=63 // pred_fallthru
          _
        %s479 = sand.u32 %s33, 1
        %s480 = scalar_lea.sflag [#allocation6], %s479
        %s481 = sand.u32 %s107, 1
        %s482 = smul.addr %s481, 4
        %s483 = scalar_lea.vmem [#allocation7], %s482
        // Predicated region
        $region73: #{tpu_custom_call.1} parent=63 // pred_check
          %p484 = pneg %p120
        $region74: #{tpu_custom_call.1} parent=63 // pred_check_branch
          %486 = sbr.rel (%p484) target = $region76
        $region75: #{tpu_custom_call.1} parent=63 // pred_region
          %487 = dma.done %s480, 64
        $region76: #{tpu_custom_call.1} parent=63 // pred_fallthru
          _
        // Predicated region
        $region77: #{tpu_custom_call.1} parent=63 // pred_check
          %p488 = pneg %p141
        $region78: #{tpu_custom_call.1} parent=63 // pred_check_branch
          %490 = sbr.rel (%p488) target = $region80
        $region79: #{tpu_custom_call.1} parent=63 // pred_region
          %491 = dma.done [#allocation9], 1024
        $region80: #{tpu_custom_call.1} parent=63 // pred_fallthru
          _
        // Predicated region
        $region81: #{tpu_custom_call.1} parent=63 // pred_check
          %p492 = pneg %p183
        $region82: #{tpu_custom_call.1} parent=63 // pred_check_branch
          %494 = sbr.rel (%p492) target = $region84
        $region83: #{tpu_custom_call.1} parent=63 // pred_region
          %495 = dma.done [#allocation9], 1024
        $region84: #{tpu_custom_call.1} parent=63 // pred_fallthru
          _
        // Predicated region
        $region85: #{tpu_custom_call.1} parent=63 // pred_check
          %p496 = pneg %p225
        $region86: #{tpu_custom_call.1} parent=63 // pred_check_branch
          %498 = sbr.rel (%p496) target = $region88
        $region87: #{tpu_custom_call.1} parent=63 // pred_region
          %499 = dma.done [#allocation12], 1024
        $region88: #{tpu_custom_call.1} parent=63 // pred_fallthru
          _
        // Predicated region
        $region89: #{tpu_custom_call.1} parent=63 // pred_check
          %p500 = pneg %p267
        $region90: #{tpu_custom_call.1} parent=63 // pred_check_branch
          %502 = sbr.rel (%p500) target = $region92
        $region91: #{tpu_custom_call.1} parent=63 // pred_region
          %503 = dma.done [#allocation12], 1024
        $region92: #{tpu_custom_call.1} parent=63 // pred_fallthru
          _
        %s504 = sand.u32 %s55, 1
        %s505 = scalar_lea.sflag [#allocation3], %s504
        %s506 = sand.u32 %s55, 1
        %s507 = smul.addr %s506, 4
        %s508 = scalar_lea.vmem [#allocation2], %s507
        %p509 = pneg %p68
        %p510 = pneg %p65
        %s511 = sand.u32 %s33, 1
        %s512 = scalar_lea.sflag [#allocation6], %s511
        %s513 = sand.u32 %s81, 1
        %s514 = smul.addr %s513, 4
        %s515 = scalar_lea.vmem [#allocation5], %s514
        %p516 = pneg %p94
        %p517 = pneg %p91
        %s518 = sand.u32 %s33, 1
        %s519 = scalar_lea.sflag [#allocation6], %s518
        %s520 = sand.u32 %s107, 1
        %s521 = smul.addr %s520, 4
        %s522 = scalar_lea.vmem [#allocation7], %s521
        %p523 = pneg %p120
        %p524 = pneg %p117
        %p525 = pneg %p141
        %p526 = pneg %p138
        %p527 = pneg %p162
        %p528 = pneg %p159
        %p529 = pneg %p183
        %p530 = pneg %p180
        %p531 = pneg %p204
        %p532 = pneg %p201
        %p533 = pneg %p225
        %p534 = pneg %p222
        %p535 = pneg %p246
        %p536 = pneg %p243
        %p537 = pneg %p267
        %p538 = pneg %p264
        %p539 = pneg %p288
        %p540 = pneg %p285
        %p541 = pneg %p316
        %p542 = pneg %p313
        %s543 = sand.u32 %s303, 1
        %s544 = scalar_lea.sflag [#allocation4], %s543
        %s545 = sand.u32 %s303, 1
        %s546 = smul.addr %s545, 8
        %s547 = scalar_lea.vmem [#allocation14], %s546
        %v549 = vld [vmem:[%s465] sm:$0xf]
        %v550 = vld [vmem:[%s474] sm:$0xf]
        %v551 = vld [vmem:[%s483] sm:$0xf]
        %v552 = vld [vmem:[#allocation8] sm:$0xf]
        %v553 = vld [vmem:[#allocation8 + $0x4] sm:$0xf]
        %v554 = vld [vmem:[#allocation8 + $0x8] sm:$0xf]
        %v555 = vld [vmem:[#allocation8 + $0xc] sm:$0xf]
        %v556 = vld [vmem:[#allocation8 + $0x10] sm:$0xf]
        %v557 = vld [vmem:[#allocation8 + $0x14] sm:$0xf]
        %v558 = vld [vmem:[#allocation8 + $0x18] sm:$0xf]
        %v559 = vld [vmem:[#allocation8 + $0x1c] sm:$0xf]
        %v560 = vld [vmem:[#allocation8 + $0x20] sm:$0xf]
        %v561 = vld [vmem:[#allocation8 + $0x24] sm:$0xf]
        %v562 = vld [vmem:[#allocation8 + $0x28] sm:$0xf]
        %v563 = vld [vmem:[#allocation8 + $0x2c] sm:$0xf]
        %v564 = vld [vmem:[#allocation8 + $0x30] sm:$0xf]
        %v565 = vld [vmem:[#allocation8 + $0x34] sm:$0xf]
        %v566 = vld [vmem:[#allocation8 + $0x38] sm:$0xf]
        %v567 = vld [vmem:[#allocation8 + $0x3c] sm:$0xf]
        %v568 = vld [vmem:[%s4] sm:$0x1]
        %v570 = vlaneseq
        %v571 = vshrl.u32 %v570, 7
        %v572 = vsub.s32 0, %v571
        %v573 = vrot.slane %v568, %v572
        %v591 = vunpack.c.l.b16 %v552
        %v592 = vunpack.c.l.b16 %v553
        %v593 = vunpack.c.l.b16 %v554
        %v594 = vunpack.c.l.b16 %v555
        %v595 = vunpack.c.l.b16 %v556
        %v596 = vunpack.c.l.b16 %v557
        %v597 = vunpack.c.l.b16 %v558
        %v598 = vunpack.c.l.b16 %v559
        %v599 = vunpack.c.l.b16 %v560
        %v600 = vunpack.c.l.b16 %v561
        %v601 = vunpack.c.l.b16 %v562
        %v602 = vunpack.c.l.b16 %v563
        %v603 = vunpack.c.l.b16 %v564
        %v604 = vunpack.c.l.b16 %v565
        %v605 = vunpack.c.l.b16 %v566
        %v606 = vunpack.c.l.b16 %v567
        %v607 = vpack.c.b16 %v592, %v591
        %v608 = vpack.c.b16 %v594, %v593
        %v609 = vpack.c.b16 %v596, %v595
        %v610 = vpack.c.b16 %v598, %v597
        %v611 = vpack.c.b16 %v600, %v599
        %v612 = vpack.c.b16 %v602, %v601
        %v613 = vpack.c.b16 %v604, %v603
        %v614 = vpack.c.b16 %v606, %v605
        %623 = vmatprep.subr.bf16.mxu0 0
        %624 = vmatpush1.bf16.msra.mxu0 %v614
        %625 = vmatprep.subr.bf16.mxu0 0
        %626 = vmatpush1.bf16.msra.mxu0 %v613
        %627 = vmatprep.subr.bf16.mxu0 0
        %628 = vmatpush1.bf16.msra.mxu0 %v612
        %629 = vmatprep.subr.bf16.mxu0 0
        %630 = vmatpush1.bf16.msra.mxu0 %v611
        %631 = vmatprep.subr.bf16.mxu0 0
        %632 = vmatpush1.bf16.msra.mxu0 %v610
        %633 = vmatprep.subr.bf16.mxu0 0
        %634 = vmatpush1.bf16.msra.mxu0 %v609
        %635 = vmatprep.subr.bf16.mxu0 0
        %636 = vmatpush1.bf16.msra.mxu0 %v608
        %637 = vmatprep.subr.bf16.mxu0 0
        %638 = vmatpush1.bf16.msra.mxu0 %v607
        %639 = vmatprep.subr.bf16.mxu0 0
        %640 = vmatpush2.bf16.msra.mxu0 0
        %641 = vmatprep.subr.bf16.mxu0 0
        %642 = vmatpush2.bf16.msra.mxu0 0
        %643 = vmatprep.subr.bf16.mxu0 0
        %644 = vmatpush2.bf16.msra.mxu0 0
        %645 = vmatprep.subr.bf16.mxu0 0
        %646 = vmatpush2.bf16.msra.mxu0 0
        %647 = vmatprep.subr.bf16.mxu0 0
        %648 = vmatpush2.bf16.msra.mxu0 0
        %649 = vmatprep.subr.bf16.mxu0 0
        %650 = vmatpush2.bf16.msra.mxu0 0
        %651 = vmatprep.subr.bf16.mxu0 0
        %652 = vmatpush2.bf16.msra.mxu0 0
        %653 = vmatprep.subr.bf16.mxu0 0
        %654 = vmatpush2.bf16.msra.mxu0 0
        %655 = vmatprep.mubr.bf16.mxu0 0
        %656 = vmatmul.mubr.bf16.gmra.mxu0 %v549
        %v657 = vpop.f32.mrf.mxu0
        %v658 = vadd.f32 %v573, %v657
        %v659 = vpop.f32.mrf.mxu0
        %v660 = vpop.f32.mrf.mxu0
        %v661 = vpop.f32.mrf.mxu0
        %662 = vdwg.mxu0
        %v663 = vmul.f32 %v658, 0.17677669
        %v664 = vld [vmem:[#allocation10] sm:$0xf]
        %v665 = vld [vmem:[#allocation10 + $0x4] sm:$0xf]
        %v666 = vld [vmem:[#allocation10 + $0x8] sm:$0xf]
        %v667 = vld [vmem:[#allocation10 + $0xc] sm:$0xf]
        %v668 = vld [vmem:[#allocation10 + $0x10] sm:$0xf]
        %v669 = vld [vmem:[#allocation10 + $0x14] sm:$0xf]
        %v670 = vld [vmem:[#allocation10 + $0x18] sm:$0xf]
        %v671 = vld [vmem:[#allocation10 + $0x1c] sm:$0xf]
        %v672 = vld [vmem:[#allocation10 + $0x20] sm:$0xf]
        %v673 = vld [vmem:[#allocation10 + $0x24] sm:$0xf]
        %v674 = vld [vmem:[#allocation10 + $0x28] sm:$0xf]
        %v675 = vld [vmem:[#allocation10 + $0x2c] sm:$0xf]
        %v676 = vld [vmem:[#allocation10 + $0x30] sm:$0xf]
        %v677 = vld [vmem:[#allocation10 + $0x34] sm:$0xf]
        %v678 = vld [vmem:[#allocation10 + $0x38] sm:$0xf]
        %v679 = vld [vmem:[#allocation10 + $0x3c] sm:$0xf]
        %v680 = vld [vmem:[%s6] sm:$0x1]
        %v682 = vlaneseq
        %v683 = vshrl.u32 %v682, 7
        %v684 = vsub.s32 0, %v683
        %v685 = vrot.slane %v680, %v684
        %v703 = vunpack.c.l.b16 %v664
        %v704 = vunpack.c.l.b16 %v665
        %v705 = vunpack.c.l.b16 %v666
        %v706 = vunpack.c.l.b16 %v667
        %v707 = vunpack.c.l.b16 %v668
        %v708 = vunpack.c.l.b16 %v669
        %v709 = vunpack.c.l.b16 %v670
        %v710 = vunpack.c.l.b16 %v671
        %v711 = vunpack.c.l.b16 %v672
        %v712 = vunpack.c.l.b16 %v673
        %v713 = vunpack.c.l.b16 %v674
        %v714 = vunpack.c.l.b16 %v675
        %v715 = vunpack.c.l.b16 %v676
        %v716 = vunpack.c.l.b16 %v677
        %v717 = vunpack.c.l.b16 %v678
        %v718 = vunpack.c.l.b16 %v679
        %v719 = vpack.c.b16 %v704, %v703
        %v720 = vpack.c.b16 %v706, %v705
        %v721 = vpack.c.b16 %v708, %v707
        %v722 = vpack.c.b16 %v710, %v709
        %v723 = vpack.c.b16 %v712, %v711
        %v724 = vpack.c.b16 %v714, %v713
        %v725 = vpack.c.b16 %v716, %v715
        %v726 = vpack.c.b16 %v718, %v717
        %735 = vmatprep.subr.bf16.mxu0 0
        %736 = vmatpush1.bf16.msra.mxu0 %v726
        %737 = vmatprep.subr.bf16.mxu0 0
        %738 = vmatpush1.bf16.msra.mxu0 %v725
        %739 = vmatprep.subr.bf16.mxu0 0
        %740 = vmatpush1.bf16.msra.mxu0 %v724
        %741 = vmatprep.subr.bf16.mxu0 0
        %742 = vmatpush1.bf16.msra.mxu0 %v723
        %743 = vmatprep.subr.bf16.mxu0 0
        %744 = vmatpush1.bf16.msra.mxu0 %v722
        %745 = vmatprep.subr.bf16.mxu0 0
        %746 = vmatpush1.bf16.msra.mxu0 %v721
        %747 = vmatprep.subr.bf16.mxu0 0
        %748 = vmatpush1.bf16.msra.mxu0 %v720
        %749 = vmatprep.subr.bf16.mxu0 0
        %750 = vmatpush1.bf16.msra.mxu0 %v719
        %751 = vmatprep.subr.bf16.mxu0 0
        %752 = vmatpush2.bf16.msra.mxu0 0
        %753 = vmatprep.subr.bf16.mxu0 0
        %754 = vmatpush2.bf16.msra.mxu0 0
        %755 = vmatprep.subr.bf16.mxu0 0
        %756 = vmatpush2.bf16.msra.mxu0 0
        %757 = vmatprep.subr.bf16.mxu0 0
        %758 = vmatpush2.bf16.msra.mxu0 0
        %759 = vmatprep.subr.bf16.mxu0 0
        %760 = vmatpush2.bf16.msra.mxu0 0
        %761 = vmatprep.subr.bf16.mxu0 0
        %762 = vmatpush2.bf16.msra.mxu0 0
        %763 = vmatprep.subr.bf16.mxu0 0
        %764 = vmatpush2.bf16.msra.mxu0 0
        %765 = vmatprep.subr.bf16.mxu0 0
        %766 = vmatpush2.bf16.msra.mxu0 0
        %767 = vmatprep.mubr.bf16.mxu0 0
        %768 = vmatmul.mubr.bf16.gmra.mxu0 %v550
        %v769 = vpop.f32.mrf.mxu0
        %v770 = vadd.f32 %v685, %v769
        %v771 = vpop.f32.mrf.mxu0
        %v772 = vpop.f32.mrf.mxu0
        %v773 = vpop.f32.mrf.mxu0
        %774 = vdwg.mxu0
        %v775 = vld [vmem:[#allocation11] sm:$0xf]
        %v776 = vld [vmem:[#allocation11 + $0x4] sm:$0xf]
        %v777 = vld [vmem:[#allocation11 + $0x8] sm:$0xf]
        %v778 = vld [vmem:[#allocation11 + $0xc] sm:$0xf]
        %v779 = vld [vmem:[#allocation11 + $0x10] sm:$0xf]
        %v780 = vld [vmem:[#allocation11 + $0x14] sm:$0xf]
        %v781 = vld [vmem:[#allocation11 + $0x18] sm:$0xf]
        %v782 = vld [vmem:[#allocation11 + $0x1c] sm:$0xf]
        %v783 = vld [vmem:[#allocation11 + $0x20] sm:$0xf]
        %v784 = vld [vmem:[#allocation11 + $0x24] sm:$0xf]
        %v785 = vld [vmem:[#allocation11 + $0x28] sm:$0xf]
        %v786 = vld [vmem:[#allocation11 + $0x2c] sm:$0xf]
        %v787 = vld [vmem:[#allocation11 + $0x30] sm:$0xf]
        %v788 = vld [vmem:[#allocation11 + $0x34] sm:$0xf]
        %v789 = vld [vmem:[#allocation11 + $0x38] sm:$0xf]
        %v790 = vld [vmem:[#allocation11 + $0x3c] sm:$0xf]
        %v791 = vld [vmem:[%s8] sm:$0x1]
        %v793 = vlaneseq
        %v794 = vshrl.u32 %v793, 7
        %v795 = vsub.s32 0, %v794
        %v796 = vrot.slane %v791, %v795
        %v814 = vunpack.c.l.b16 %v775
        %v815 = vunpack.c.l.b16 %v776
        %v816 = vunpack.c.l.b16 %v777
        %v817 = vunpack.c.l.b16 %v778
        %v818 = vunpack.c.l.b16 %v779
        %v819 = vunpack.c.l.b16 %v780
        %v820 = vunpack.c.l.b16 %v781
        %v821 = vunpack.c.l.b16 %v782
        %v822 = vunpack.c.l.b16 %v783
        %v823 = vunpack.c.l.b16 %v784
        %v824 = vunpack.c.l.b16 %v785
        %v825 = vunpack.c.l.b16 %v786
        %v826 = vunpack.c.l.b16 %v787
        %v827 = vunpack.c.l.b16 %v788
        %v828 = vunpack.c.l.b16 %v789
        %v829 = vunpack.c.l.b16 %v790
        %v830 = vpack.c.b16 %v815, %v814
        %v831 = vpack.c.b16 %v817, %v816
        %v832 = vpack.c.b16 %v819, %v818
        %v833 = vpack.c.b16 %v821, %v820
        %v834 = vpack.c.b16 %v823, %v822
        %v835 = vpack.c.b16 %v825, %v824
        %v836 = vpack.c.b16 %v827, %v826
        %v837 = vpack.c.b16 %v829, %v828
        %846 = vmatprep.subr.bf16.mxu0 0
        %847 = vmatpush1.bf16.msra.mxu0 %v837
        %848 = vmatprep.subr.bf16.mxu0 0
        %849 = vmatpush1.bf16.msra.mxu0 %v836
        %850 = vmatprep.subr.bf16.mxu0 0
        %851 = vmatpush1.bf16.msra.mxu0 %v835
        %852 = vmatprep.subr.bf16.mxu0 0
        %853 = vmatpush1.bf16.msra.mxu0 %v834
        %854 = vmatprep.subr.bf16.mxu0 0
        %855 = vmatpush1.bf16.msra.mxu0 %v833
        %856 = vmatprep.subr.bf16.mxu0 0
        %857 = vmatpush1.bf16.msra.mxu0 %v832
        %858 = vmatprep.subr.bf16.mxu0 0
        %859 = vmatpush1.bf16.msra.mxu0 %v831
        %860 = vmatprep.subr.bf16.mxu0 0
        %861 = vmatpush1.bf16.msra.mxu0 %v830
        %862 = vmatprep.subr.bf16.mxu0 0
        %863 = vmatpush2.bf16.msra.mxu0 0
        %864 = vmatprep.subr.bf16.mxu0 0
        %865 = vmatpush2.bf16.msra.mxu0 0
        %866 = vmatprep.subr.bf16.mxu0 0
        %867 = vmatpush2.bf16.msra.mxu0 0
        %868 = vmatprep.subr.bf16.mxu0 0
        %869 = vmatpush2.bf16.msra.mxu0 0
        %870 = vmatprep.subr.bf16.mxu0 0
        %871 = vmatpush2.bf16.msra.mxu0 0
        %872 = vmatprep.subr.bf16.mxu0 0
        %873 = vmatpush2.bf16.msra.mxu0 0
        %874 = vmatprep.subr.bf16.mxu0 0
        %875 = vmatpush2.bf16.msra.mxu0 0
        %876 = vmatprep.subr.bf16.mxu0 0
        %877 = vmatpush2.bf16.msra.mxu0 0
        %878 = vmatprep.mubr.bf16.mxu0 0
        %879 = vmatmul.mubr.bf16.gmra.mxu0 %v551
        %v880 = vpop.f32.mrf.mxu0
        %v881 = vadd.f32 %v796, %v880
        %v882 = vpop.f32.mrf.mxu0
        %v883 = vpop.f32.mrf.mxu0
        %v884 = vpop.f32.mrf.mxu0
        %885 = vdwg.mxu0
        %887 = vrot.lane.b32.xlu0 %v663, 96
        %v888 = vpop.permute.xlu0 %887
        %890 = vrot.lane.b32.xlu0 %v663, 64
        %v891 = vpop.permute.xlu0 %890
        %893 = vrot.lane.b32.xlu0 %v663, 32
        %v894 = vpop.permute.xlu0 %893
        %v896 = vcombine.low %v663, %v891
        %v897 = vcombine.high %v663, %v891
        %v899 = vunpack.c.l.s4 1983009808
        %v900 = vunpack.c.0.s8 %v899
        %v901 = vlaneseq
        %v902 = vshrl.u32 %v901, 7
        %v903 = vsub.s32 %v900, %v902
        %v904 = vrot.slane %v896, %v903
        %v906 = vunpack.c.l.s4 1983009808
        %v907 = vunpack.c.0.s8 %v906
        %v908 = vlaneseq
        %v909 = vshrl.u32 %v908, 7
        %v910 = vsub.s32 %v907, %v909
        %v911 = vrot.slane %v897, %v910
        %v912 = vcombine.low %v888, %v894
        %v913 = vcombine.high %v888, %v894
        %v915 = vunpack.c.l.s4 1983009808
        %v916 = vunpack.c.0.s8 %v915
        %v917 = vlaneseq
        %v918 = vshrl.u32 %v917, 7
        %v919 = vsub.s32 %v916, %v918
        %v920 = vrot.slane %v912, %v919
        %v922 = vunpack.c.l.s4 1983009808
        %v923 = vunpack.c.0.s8 %v922
        %v924 = vlaneseq
        %v925 = vshrl.u32 %v924, 7
        %v926 = vsub.s32 %v923, %v925
        %v927 = vrot.slane %v913, %v926
        %v928 = vcombine.low %v904, %v920
        %v929 = vcombine.high %v904, %v920
        %v931 = vunpack.c.l.s4 1934713408
        %v932 = vunpack.c.0.s8 %v931
        %v933 = vlaneseq
        %v934 = vshrl.u32 %v933, 7
        %v935 = vsub.s32 %v932, %v934
        %v936 = vrot.slane %v928, %v935
        %v938 = vunpack.c.l.s4 1934713408
        %v939 = vunpack.c.0.s8 %v938
        %v940 = vlaneseq
        %v941 = vshrl.u32 %v940, 7
        %v942 = vsub.s32 %v939, %v941
        %v943 = vrot.slane %v929, %v942
        %v944 = vcombine.low %v911, %v927
        %v945 = vcombine.high %v911, %v927
        %v947 = vunpack.c.l.s4 1934713408
        %v948 = vunpack.c.0.s8 %v947
        %v949 = vlaneseq
        %v950 = vshrl.u32 %v949, 7
        %v951 = vsub.s32 %v948, %v950
        %v952 = vrot.slane %v944, %v951
        %v954 = vunpack.c.l.s4 1934713408
        %v955 = vunpack.c.0.s8 %v954
        %v956 = vlaneseq
        %v957 = vshrl.u32 %v956, 7
        %v958 = vsub.s32 %v955, %v957
        %v959 = vrot.slane %v945, %v958
        %v960 = vcombine.high %v936, 0.0
        %v961 = vcombine.high %v943, 0.0
        %v962 = vcombine.high %v952, 0.0
        %v963 = vcombine.high %v959, 0.0
        %v964 = vcombine.low %v936, %v943
        %v966 = vunpack.c.l.s4 1983009808
        %v967 = vunpack.c.0.s8 %v966
        %v968 = vlaneseq
        %v969 = vshrl.u32 %v968, 7
        %v970 = vsub.s32 %v967, %v969
        %v971 = vrot.slane %v964, %v970
        %v972 = vcombine.low %v960, %v961
        %v974 = vunpack.c.l.s4 1983009808
        %v975 = vunpack.c.0.s8 %v974
        %v976 = vlaneseq
        %v977 = vshrl.u32 %v976, 7
        %v978 = vsub.s32 %v975, %v977
        %v979 = vrot.slane %v972, %v978
        %v980 = vcombine.low %v952, %v959
        %v982 = vunpack.c.l.s4 1983009808
        %v983 = vunpack.c.0.s8 %v982
        %v984 = vlaneseq
        %v985 = vshrl.u32 %v984, 7
        %v986 = vsub.s32 %v983, %v985
        %v987 = vrot.slane %v980, %v986
        %v988 = vcombine.low %v962, %v963
        %v990 = vunpack.c.l.s4 1983009808
        %v991 = vunpack.c.0.s8 %v990
        %v992 = vlaneseq
        %v993 = vshrl.u32 %v992, 7
        %v994 = vsub.s32 %v991, %v993
        %v995 = vrot.slane %v988, %v994
        %v996 = vcombine.low %v971, %v979
        %v997 = vcombine.high %v971, %v979
        %v999 = vunpack.c.l.s4 1934713408
        %v1000 = vunpack.c.0.s8 %v999
        %v1001 = vlaneseq
        %v1002 = vshrl.u32 %v1001, 7
        %v1003 = vsub.s32 %v1000, %v1002
        %v1004 = vrot.slane %v996, %v1003
        %v1006 = vunpack.c.l.s4 1934713408
        %v1007 = vunpack.c.0.s8 %v1006
        %v1008 = vlaneseq
        %v1009 = vshrl.u32 %v1008, 7
        %v1010 = vsub.s32 %v1007, %v1009
        %v1011 = vrot.slane %v997, %v1010
        %v1012 = vcombine.low %v987, %v995
        %v1013 = vcombine.high %v987, %v995
        %v1015 = vunpack.c.l.s4 1934713408
        %v1016 = vunpack.c.0.s8 %v1015
        %v1017 = vlaneseq
        %v1018 = vshrl.u32 %v1017, 7
        %v1019 = vsub.s32 %v1016, %v1018
        %v1020 = vrot.slane %v1012, %v1019
        %v1022 = vunpack.c.l.s4 1934713408
        %v1023 = vunpack.c.0.s8 %v1022
        %v1024 = vlaneseq
        %v1025 = vshrl.u32 %v1024, 7
        %v1026 = vsub.s32 %v1023, %v1025
        %v1027 = vrot.slane %v1013, %v1026
        %v1028 = vcombine.low %v1004, %v1020
        %v1029 = vcombine.high %v1004, %v1020
        %v1030 = vcombine.low %v1011, %v1027
        %v1031 = vcombine.high %v1011, %v1027
        %v1032 = vpack.c.bf16 %v1028, %v1028
        %v1033 = vpack.c.bf16 %v1029, %v1029
        %v1034 = vpack.c.bf16 %v1030, %v1030
        %v1035 = vpack.c.bf16 %v1031, %v1031
        %1037 = vrot.lane.b32.xlu0 %v770, 96
        %v1038 = vpop.permute.xlu0 %1037
        %1040 = vrot.lane.b32.xlu0 %v770, 64
        %v1041 = vpop.permute.xlu0 %1040
        %1043 = vrot.lane.b32.xlu0 %v770, 32
        %v1044 = vpop.permute.xlu0 %1043
        %v1046 = vcombine.low %v770, %v1041
        %v1047 = vcombine.high %v770, %v1041
        %v1049 = vunpack.c.l.s4 1983009808
        %v1050 = vunpack.c.0.s8 %v1049
        %v1051 = vlaneseq
        %v1052 = vshrl.u32 %v1051, 7
        %v1053 = vsub.s32 %v1050, %v1052
        %v1054 = vrot.slane %v1046, %v1053
        %v1056 = vunpack.c.l.s4 1983009808
        %v1057 = vunpack.c.0.s8 %v1056
        %v1058 = vlaneseq
        %v1059 = vshrl.u32 %v1058, 7
        %v1060 = vsub.s32 %v1057, %v1059
        %v1061 = vrot.slane %v1047, %v1060
        %v1062 = vcombine.low %v1038, %v1044
        %v1063 = vcombine.high %v1038, %v1044
        %v1065 = vunpack.c.l.s4 1983009808
        %v1066 = vunpack.c.0.s8 %v1065
        %v1067 = vlaneseq
        %v1068 = vshrl.u32 %v1067, 7
        %v1069 = vsub.s32 %v1066, %v1068
        %v1070 = vrot.slane %v1062, %v1069
        %v1072 = vunpack.c.l.s4 1983009808
        %v1073 = vunpack.c.0.s8 %v1072
        %v1074 = vlaneseq
        %v1075 = vshrl.u32 %v1074, 7
        %v1076 = vsub.s32 %v1073, %v1075
        %v1077 = vrot.slane %v1063, %v1076
        %v1078 = vcombine.low %v1054, %v1070
        %v1079 = vcombine.high %v1054, %v1070
        %v1081 = vunpack.c.l.s4 1934713408
        %v1082 = vunpack.c.0.s8 %v1081
        %v1083 = vlaneseq
        %v1084 = vshrl.u32 %v1083, 7
        %v1085 = vsub.s32 %v1082, %v1084
        %v1086 = vrot.slane %v1078, %v1085
        %v1088 = vunpack.c.l.s4 1934713408
        %v1089 = vunpack.c.0.s8 %v1088
        %v1090 = vlaneseq
        %v1091 = vshrl.u32 %v1090, 7
        %v1092 = vsub.s32 %v1089, %v1091
        %v1093 = vrot.slane %v1079, %v1092
        %v1094 = vcombine.low %v1061, %v1077
        %v1095 = vcombine.high %v1061, %v1077
        %v1097 = vunpack.c.l.s4 1934713408
        %v1098 = vunpack.c.0.s8 %v1097
        %v1099 = vlaneseq
        %v1100 = vshrl.u32 %v1099, 7
        %v1101 = vsub.s32 %v1098, %v1100
        %v1102 = vrot.slane %v1094, %v1101
        %v1104 = vunpack.c.l.s4 1934713408
        %v1105 = vunpack.c.0.s8 %v1104
        %v1106 = vlaneseq
        %v1107 = vshrl.u32 %v1106, 7
        %v1108 = vsub.s32 %v1105, %v1107
        %v1109 = vrot.slane %v1095, %v1108
        %v1110 = vcombine.high %v1086, 0.0
        %v1111 = vcombine.high %v1093, 0.0
        %v1112 = vcombine.high %v1102, 0.0
        %v1113 = vcombine.high %v1109, 0.0
        %v1114 = vcombine.low %v1086, %v1093
        %v1116 = vunpack.c.l.s4 1983009808
        %v1117 = vunpack.c.0.s8 %v1116
        %v1118 = vlaneseq
        %v1119 = vshrl.u32 %v1118, 7
        %v1120 = vsub.s32 %v1117, %v1119
        %v1121 = vrot.slane %v1114, %v1120
        %v1122 = vcombine.low %v1110, %v1111
        %v1124 = vunpack.c.l.s4 1983009808
        %v1125 = vunpack.c.0.s8 %v1124
        %v1126 = vlaneseq
        %v1127 = vshrl.u32 %v1126, 7
        %v1128 = vsub.s32 %v1125, %v1127
        %v1129 = vrot.slane %v1122, %v1128
        %v1130 = vcombine.low %v1102, %v1109
        %v1132 = vunpack.c.l.s4 1983009808
        %v1133 = vunpack.c.0.s8 %v1132
        %v1134 = vlaneseq
        %v1135 = vshrl.u32 %v1134, 7
        %v1136 = vsub.s32 %v1133, %v1135
        %v1137 = vrot.slane %v1130, %v1136
        %v1138 = vcombine.low %v1112, %v1113
        %v1140 = vunpack.c.l.s4 1983009808
        %v1141 = vunpack.c.0.s8 %v1140
        %v1142 = vlaneseq
        %v1143 = vshrl.u32 %v1142, 7
        %v1144 = vsub.s32 %v1141, %v1143
        %v1145 = vrot.slane %v1138, %v1144
        %v1146 = vcombine.low %v1121, %v1129
        %v1147 = vcombine.high %v1121, %v1129
        %v1149 = vunpack.c.l.s4 1934713408
        %v1150 = vunpack.c.0.s8 %v1149
        %v1151 = vlaneseq
        %v1152 = vshrl.u32 %v1151, 7
        %v1153 = vsub.s32 %v1150, %v1152
        %v1154 = vrot.slane %v1146, %v1153
        %v1156 = vunpack.c.l.s4 1934713408
        %v1157 = vunpack.c.0.s8 %v1156
        %v1158 = vlaneseq
        %v1159 = vshrl.u32 %v1158, 7
        %v1160 = vsub.s32 %v1157, %v1159
        %v1161 = vrot.slane %v1147, %v1160
        %v1162 = vcombine.low %v1137, %v1145
        %v1163 = vcombine.high %v1137, %v1145
        %v1165 = vunpack.c.l.s4 1934713408
        %v1166 = vunpack.c.0.s8 %v1165
        %v1167 = vlaneseq
        %v1168 = vshrl.u32 %v1167, 7
        %v1169 = vsub.s32 %v1166, %v1168
        %v1170 = vrot.slane %v1162, %v1169
        %v1172 = vunpack.c.l.s4 1934713408
        %v1173 = vunpack.c.0.s8 %v1172
        %v1174 = vlaneseq
        %v1175 = vshrl.u32 %v1174, 7
        %v1176 = vsub.s32 %v1173, %v1175
        %v1177 = vrot.slane %v1163, %v1176
        %v1178 = vcombine.low %v1154, %v1170
        %v1179 = vcombine.high %v1154, %v1170
        %v1180 = vcombine.low %v1161, %v1177
        %v1181 = vcombine.high %v1161, %v1177
        %v1182 = vpack.c.bf16 %v1178, %v1178
        %v1183 = vpack.c.bf16 %v1179, %v1179
        %v1184 = vpack.c.bf16 %v1180, %v1180
        %v1185 = vpack.c.bf16 %v1181, %v1181
        %1187 = vrot.lane.b32.xlu0 %v881, 96
        %v1188 = vpop.permute.xlu0 %1187
        %1190 = vrot.lane.b32.xlu0 %v881, 64
        %v1191 = vpop.permute.xlu0 %1190
        %1193 = vrot.lane.b32.xlu0 %v881, 32
        %v1194 = vpop.permute.xlu0 %1193
        %v1196 = vcombine.low %v881, %v1191
        %v1197 = vcombine.high %v881, %v1191
        %v1199 = vunpack.c.l.s4 1983009808
        %v1200 = vunpack.c.0.s8 %v1199
        %v1201 = vlaneseq
        %v1202 = vshrl.u32 %v1201, 7
        %v1203 = vsub.s32 %v1200, %v1202
        %v1204 = vrot.slane %v1196, %v1203
        %v1206 = vunpack.c.l.s4 1983009808
        %v1207 = vunpack.c.0.s8 %v1206
        %v1208 = vlaneseq
        %v1209 = vshrl.u32 %v1208, 7
        %v1210 = vsub.s32 %v1207, %v1209
        %v1211 = vrot.slane %v1197, %v1210
        %v1212 = vcombine.low %v1188, %v1194
        %v1213 = vcombine.high %v1188, %v1194
        %v1215 = vunpack.c.l.s4 1983009808
        %v1216 = vunpack.c.0.s8 %v1215
        %v1217 = vlaneseq
        %v1218 = vshrl.u32 %v1217, 7
        %v1219 = vsub.s32 %v1216, %v1218
        %v1220 = vrot.slane %v1212, %v1219
        %v1222 = vunpack.c.l.s4 1983009808
        %v1223 = vunpack.c.0.s8 %v1222
        %v1224 = vlaneseq
        %v1225 = vshrl.u32 %v1224, 7
        %v1226 = vsub.s32 %v1223, %v1225
        %v1227 = vrot.slane %v1213, %v1226
        %v1228 = vcombine.low %v1204, %v1220
        %v1229 = vcombine.high %v1204, %v1220
        %v1231 = vunpack.c.l.s4 1934713408
        %v1232 = vunpack.c.0.s8 %v1231
        %v1233 = vlaneseq
        %v1234 = vshrl.u32 %v1233, 7
        %v1235 = vsub.s32 %v1232, %v1234
        %v1236 = vrot.slane %v1228, %v1235
        %v1238 = vunpack.c.l.s4 1934713408
        %v1239 = vunpack.c.0.s8 %v1238
        %v1240 = vlaneseq
        %v1241 = vshrl.u32 %v1240, 7
        %v1242 = vsub.s32 %v1239, %v1241
        %v1243 = vrot.slane %v1229, %v1242
        %v1244 = vcombine.low %v1211, %v1227
        %v1245 = vcombine.high %v1211, %v1227
        %v1247 = vunpack.c.l.s4 1934713408
        %v1248 = vunpack.c.0.s8 %v1247
        %v1249 = vlaneseq
        %v1250 = vshrl.u32 %v1249, 7
        %v1251 = vsub.s32 %v1248, %v1250
        %v1252 = vrot.slane %v1244, %v1251
        %v1254 = vunpack.c.l.s4 1934713408
        %v1255 = vunpack.c.0.s8 %v1254
        %v1256 = vlaneseq
        %v1257 = vshrl.u32 %v1256, 7
        %v1258 = vsub.s32 %v1255, %v1257
        %v1259 = vrot.slane %v1245, %v1258
        %v1260 = vcombine.high %v1236, 0.0
        %v1261 = vcombine.high %v1243, 0.0
        %v1262 = vcombine.high %v1252, 0.0
        %v1263 = vcombine.high %v1259, 0.0
        %v1264 = vcombine.low %v1236, %v1243
        %v1266 = vunpack.c.l.s4 1983009808
        %v1267 = vunpack.c.0.s8 %v1266
        %v1268 = vlaneseq
        %v1269 = vshrl.u32 %v1268, 7
        %v1270 = vsub.s32 %v1267, %v1269
        %v1271 = vrot.slane %v1264, %v1270
        %v1272 = vcombine.low %v1260, %v1261
        %v1274 = vunpack.c.l.s4 1983009808
        %v1275 = vunpack.c.0.s8 %v1274
        %v1276 = vlaneseq
        %v1277 = vshrl.u32 %v1276, 7
        %v1278 = vsub.s32 %v1275, %v1277
        %v1279 = vrot.slane %v1272, %v1278
        %v1280 = vcombine.low %v1252, %v1259
        %v1282 = vunpack.c.l.s4 1983009808
        %v1283 = vunpack.c.0.s8 %v1282
        %v1284 = vlaneseq
        %v1285 = vshrl.u32 %v1284, 7
        %v1286 = vsub.s32 %v1283, %v1285
        %v1287 = vrot.slane %v1280, %v1286
        %v1288 = vcombine.low %v1262, %v1263
        %v1290 = vunpack.c.l.s4 1983009808
        %v1291 = vunpack.c.0.s8 %v1290
        %v1292 = vlaneseq
        %v1293 = vshrl.u32 %v1292, 7
        %v1294 = vsub.s32 %v1291, %v1293
        %v1295 = vrot.slane %v1288, %v1294
        %v1296 = vcombine.low %v1271, %v1279
        %v1297 = vcombine.high %v1271, %v1279
        %v1299 = vunpack.c.l.s4 1934713408
        %v1300 = vunpack.c.0.s8 %v1299
        %v1301 = vlaneseq
        %v1302 = vshrl.u32 %v1301, 7
        %v1303 = vsub.s32 %v1300, %v1302
        %v1304 = vrot.slane %v1296, %v1303
        %v1306 = vunpack.c.l.s4 1934713408
        %v1307 = vunpack.c.0.s8 %v1306
        %v1308 = vlaneseq
        %v1309 = vshrl.u32 %v1308, 7
        %v1310 = vsub.s32 %v1307, %v1309
        %v1311 = vrot.slane %v1297, %v1310
        %v1312 = vcombine.low %v1287, %v1295
        %v1313 = vcombine.high %v1287, %v1295
        %v1315 = vunpack.c.l.s4 1934713408
        %v1316 = vunpack.c.0.s8 %v1315
        %v1317 = vlaneseq
        %v1318 = vshrl.u32 %v1317, 7
        %v1319 = vsub.s32 %v1316, %v1318
        %v1320 = vrot.slane %v1312, %v1319
        %v1322 = vunpack.c.l.s4 1934713408
        %v1323 = vunpack.c.0.s8 %v1322
        %v1324 = vlaneseq
        %v1325 = vshrl.u32 %v1324, 7
        %v1326 = vsub.s32 %v1323, %v1325
        %v1327 = vrot.slane %v1313, %v1326
        %v1328 = vcombine.low %v1304, %v1320
        %v1329 = vcombine.high %v1304, %v1320
        %v1330 = vcombine.low %v1311, %v1327
        %v1331 = vcombine.high %v1311, %v1327
        %v1332 = vpack.c.bf16 %v1328, %v1328
        %v1333 = vpack.c.bf16 %v1329, %v1329
        %v1334 = vpack.c.bf16 %v1330, %v1330
        %v1335 = vpack.c.bf16 %v1331, %v1331
        %vm1336 = vcmask 261120
        %v1338 = vsel %vm1336, %v1032, 0
        %v1341 = vsel %vm1336, %v1182, 0
        %1343 = vmatprep.subr.bf16.mxu0 0
        %1344 = vmatpush1.bf16.xpose.msra.mxu0 0
        %1345 = vmatprep.subr.bf16.mxu0 0
        %1346 = vmatpush1.bf16.xpose.msra.mxu0 0
        %1347 = vmatprep.subr.bf16.mxu0 0
        %1348 = vmatpush1.bf16.xpose.msra.mxu0 0
        %1349 = vmatprep.subr.bf16.mxu0 0
        %1350 = vmatpush1.bf16.xpose.msra.mxu0 0
        %1351 = vmatprep.subr.bf16.mxu0 0
        %1352 = vmatpush1.bf16.xpose.msra.mxu0 0
        %1353 = vmatprep.subr.bf16.mxu0 0
        %1354 = vmatpush1.bf16.xpose.msra.mxu0 0
        %1355 = vmatprep.subr.bf16.mxu0 0
        %1356 = vmatpush1.bf16.xpose.msra.mxu0 0
        %1357 = vmatprep.subr.bf16.mxu0 0
        %1358 = vmatpush1.bf16.xpose.msra.mxu0 %v1341
        %1359 = vmatprep.subr.bf16.mxu0 0
        %1360 = vmatpush2.bf16.xpose.msra.mxu0 0
        %1361 = vmatprep.subr.bf16.mxu0 0
        %1362 = vmatpush2.bf16.xpose.msra.mxu0 0
        %1363 = vmatprep.subr.bf16.mxu0 0
        %1364 = vmatpush2.bf16.xpose.msra.mxu0 0
        %1365 = vmatprep.subr.bf16.mxu0 0
        %1366 = vmatpush2.bf16.xpose.msra.mxu0 0
        %1367 = vmatprep.subr.bf16.mxu0 0
        %1368 = vmatpush2.bf16.xpose.msra.mxu0 0
        %1369 = vmatprep.subr.bf16.mxu0 0
        %1370 = vmatpush2.bf16.xpose.msra.mxu0 0
        %1371 = vmatprep.subr.bf16.mxu0 0
        %1372 = vmatpush2.bf16.xpose.msra.mxu0 0
        %1373 = vmatprep.subr.bf16.mxu0 0
        %1374 = vmatpush2.bf16.xpose.msra.mxu0 0
        %1375 = vmatprep.mubr.bf16.mxu0 0
        %1376 = vmatmul.mubr.bf16.gmra.mxu0 %v1338
        %v1377 = vpop.f32.mrf.mxu0
        %v1378 = vadd.f32 0.0, %v1377
        %v1379 = vpop.f32.mrf.mxu0
        %v1380 = vpop.f32.mrf.mxu0
        %v1381 = vpop.f32.mrf.mxu0
        %1382 = vdwg.mxu0
        %v1384 = vsel %vm1336, %v1033, 0
        %v1387 = vsel %vm1336, %v1183, 0
        %1389 = vmatprep.subr.bf16.mxu0 0
        %1390 = vmatpush1.bf16.xpose.msra.mxu0 0
        %1391 = vmatprep.subr.bf16.mxu0 0
        %1392 = vmatpush1.bf16.xpose.msra.mxu0 0
        %1393 = vmatprep.subr.bf16.mxu0 0
        %1394 = vmatpush1.bf16.xpose.msra.mxu0 0
        %1395 = vmatprep.subr.bf16.mxu0 0
        %1396 = vmatpush1.bf16.xpose.msra.mxu0 0
        %1397 = vmatprep.subr.bf16.mxu0 0
        %1398 = vmatpush1.bf16.xpose.msra.mxu0 0
        %1399 = vmatprep.subr.bf16.mxu0 0
        %1400 = vmatpush1.bf16.xpose.msra.mxu0 0
        %1401 = vmatprep.subr.bf16.mxu0 0
        %1402 = vmatpush1.bf16.xpose.msra.mxu0 0
        %1403 = vmatprep.subr.bf16.mxu0 0
        %1404 = vmatpush1.bf16.xpose.msra.mxu0 %v1387
        %1405 = vmatprep.subr.bf16.mxu0 0
        %1406 = vmatpush2.bf16.xpose.msra.mxu0 0
        %1407 = vmatprep.subr.bf16.mxu0 0
        %1408 = vmatpush2.bf16.xpose.msra.mxu0 0
        %1409 = vmatprep.subr.bf16.mxu0 0
        %1410 = vmatpush2.bf16.xpose.msra.mxu0 0
        %1411 = vmatprep.subr.bf16.mxu0 0
        %1412 = vmatpush2.bf16.xpose.msra.mxu0 0
        %1413 = vmatprep.subr.bf16.mxu0 0
        %1414 = vmatpush2.bf16.xpose.msra.mxu0 0
        %1415 = vmatprep.subr.bf16.mxu0 0
        %1416 = vmatpush2.bf16.xpose.msra.mxu0 0
        %1417 = vmatprep.subr.bf16.mxu0 0
        %1418 = vmatpush2.bf16.xpose.msra.mxu0 0
        %1419 = vmatprep.subr.bf16.mxu0 0
        %1420 = vmatpush2.bf16.xpose.msra.mxu0 0
        %1421 = vmatprep.mubr.bf16.mxu0 0
        %1422 = vmatmul.mubr.bf16.gmra.mxu0 %v1384
        %v1423 = vpop.f32.mrf.mxu0
        %v1424 = vadd.f32 0.0, %v1423
        %v1425 = vpop.f32.mrf.mxu0
        %v1426 = vpop.f32.mrf.mxu0
        %v1427 = vpop.f32.mrf.mxu0
        %1428 = vdwg.mxu0
        %v1430 = vsel %vm1336, %v1034, 0
        %v1433 = vsel %vm1336, %v1184, 0
        %1435 = vmatprep.subr.bf16.mxu0 0
        %1436 = vmatpush1.bf16.xpose.msra.mxu0 0
        %1437 = vmatprep.subr.bf16.mxu0 0
        %1438 = vmatpush1.bf16.xpose.msra.mxu0 0
        %1439 = vmatprep.subr.bf16.mxu0 0
        %1440 = vmatpush1.bf16.xpose.msra.mxu0 0
        %1441 = vmatprep.subr.bf16.mxu0 0
        %1442 = vmatpush1.bf16.xpose.msra.mxu0 0
        %1443 = vmatprep.subr.bf16.mxu0 0
        %1444 = vmatpush1.bf16.xpose.msra.mxu0 0
        %1445 = vmatprep.subr.bf16.mxu0 0
        %1446 = vmatpush1.bf16.xpose.msra.mxu0 0
        %1447 = vmatprep.subr.bf16.mxu0 0
        %1448 = vmatpush1.bf16.xpose.msra.mxu0 0
        %1449 = vmatprep.subr.bf16.mxu0 0
        %1450 = vmatpush1.bf16.xpose.msra.mxu0 %v1433
        %1451 = vmatprep.subr.bf16.mxu0 0
        %1452 = vmatpush2.bf16.xpose.msra.mxu0 0
        %1453 = vmatprep.subr.bf16.mxu0 0
        %1454 = vmatpush2.bf16.xpose.msra.mxu0 0
        %1455 = vmatprep.subr.bf16.mxu0 0
        %1456 = vmatpush2.bf16.xpose.msra.mxu0 0
        %1457 = vmatprep.subr.bf16.mxu0 0
        %1458 = vmatpush2.bf16.xpose.msra.mxu0 0
        %1459 = vmatprep.subr.bf16.mxu0 0
        %1460 = vmatpush2.bf16.xpose.msra.mxu0 0
        %1461 = vmatprep.subr.bf16.mxu0 0
        %1462 = vmatpush2.bf16.xpose.msra.mxu0 0
        %1463 = vmatprep.subr.bf16.mxu0 0
        %1464 = vmatpush2.bf16.xpose.msra.mxu0 0
        %1465 = vmatprep.subr.bf16.mxu0 0
        %1466 = vmatpush2.bf16.xpose.msra.mxu0 0
        %1467 = vmatprep.mubr.bf16.mxu0 0
        %1468 = vmatmul.mubr.bf16.gmra.mxu0 %v1430
        %v1469 = vpop.f32.mrf.mxu0
        %v1470 = vadd.f32 0.0, %v1469
        %v1471 = vpop.f32.mrf.mxu0
        %v1472 = vpop.f32.mrf.mxu0
        %v1473 = vpop.f32.mrf.mxu0
        %1474 = vdwg.mxu0
        %v1476 = vsel %vm1336, %v1035, 0
        %v1479 = vsel %vm1336, %v1185, 0
        %1481 = vmatprep.subr.bf16.mxu0 0
        %1482 = vmatpush1.bf16.xpose.msra.mxu0 0
        %1483 = vmatprep.subr.bf16.mxu0 0
        %1484 = vmatpush1.bf16.xpose.msra.mxu0 0
        %1485 = vmatprep.subr.bf16.mxu0 0
        %1486 = vmatpush1.bf16.xpose.msra.mxu0 0
        %1487 = vmatprep.subr.bf16.mxu0 0
        %1488 = vmatpush1.bf16.xpose.msra.mxu0 0
        %1489 = vmatprep.subr.bf16.mxu0 0
        %1490 = vmatpush1.bf16.xpose.msra.mxu0 0
        %1491 = vmatprep.subr.bf16.mxu0 0
        %1492 = vmatpush1.bf16.xpose.msra.mxu0 0
        %1493 = vmatprep.subr.bf16.mxu0 0
        %1494 = vmatpush1.bf16.xpose.msra.mxu0 0
        %1495 = vmatprep.subr.bf16.mxu0 0
        %1496 = vmatpush1.bf16.xpose.msra.mxu0 %v1479
        %1497 = vmatprep.subr.bf16.mxu0 0
        %1498 = vmatpush2.bf16.xpose.msra.mxu0 0
        %1499 = vmatprep.subr.bf16.mxu0 0
        %1500 = vmatpush2.bf16.xpose.msra.mxu0 0
        %1501 = vmatprep.subr.bf16.mxu0 0
        %1502 = vmatpush2.bf16.xpose.msra.mxu0 0
        %1503 = vmatprep.subr.bf16.mxu0 0
        %1504 = vmatpush2.bf16.xpose.msra.mxu0 0
        %1505 = vmatprep.subr.bf16.mxu0 0
        %1506 = vmatpush2.bf16.xpose.msra.mxu0 0
        %1507 = vmatprep.subr.bf16.mxu0 0
        %1508 = vmatpush2.bf16.xpose.msra.mxu0 0
        %1509 = vmatprep.subr.bf16.mxu0 0
        %1510 = vmatpush2.bf16.xpose.msra.mxu0 0
        %1511 = vmatprep.subr.bf16.mxu0 0
        %1512 = vmatpush2.bf16.xpose.msra.mxu0 0
        %1513 = vmatprep.mubr.bf16.mxu0 0
        %1514 = vmatmul.mubr.bf16.gmra.mxu0 %v1476
        %v1515 = vpop.f32.mrf.mxu0
        %v1516 = vadd.f32 0.0, %v1515
        %v1517 = vpop.f32.mrf.mxu0
        %v1518 = vpop.f32.mrf.mxu0
        %v1519 = vpop.f32.mrf.mxu0
        %1520 = vdwg.mxu0
        %vm1521 = vcmask 64512
        %v1522 = vsel %vm1521, %v1378, -inf
        %1523 = vmax.xlane.f32.xlu0 %v1522
        %v1524 = vpop.xlane.xlu0 %1523
        %v1525 = vsel %vm1521, %v1424, -inf
        %1526 = vmax.xlane.f32.xlu0 %v1525
        %v1527 = vpop.xlane.xlu0 %1526
        %v1528 = vsel %vm1521, %v1470, -inf
        %1529 = vmax.xlane.f32.xlu0 %v1528
        %v1530 = vpop.xlane.xlu0 %1529
        %v1531 = vsel %vm1521, %v1516, -inf
        %1532 = vmax.xlane.f32.xlu0 %v1531
        %v1533 = vpop.xlane.xlu0 %1532
        %v1534 = vsub.f32 %v1378, %v1524
        %v1535 = vsub.f32 %v1424, %v1527
        %v1536 = vsub.f32 %v1470, %v1530
        %v1537 = vsub.f32 %v1516, %v1533
        %v1538 = vmul.f32 %v1534, 1.442695
        %v1539 = vpow.pop %v1538
        %v1540 = vmul.f32 %v1535, 1.442695
        %v1541 = vpow.pop %v1540
        %v1542 = vmul.f32 %v1536, 1.442695
        %v1543 = vpow.pop %v1542
        %v1544 = vmul.f32 %v1537, 1.442695
        %v1545 = vpow.pop %v1544
        %v1546 = vsel %vm1521, %v1539, 0.0
        %1547 = vadd.xlane.f32.xlu0 %v1546
        %v1548 = vpop.xlane.xlu0 %1547
        %v1549 = vsel %vm1521, %v1541, 0.0
        %1550 = vadd.xlane.f32.xlu0 %v1549
        %v1551 = vpop.xlane.xlu0 %1550
        %v1552 = vsel %vm1521, %v1543, 0.0
        %1553 = vadd.xlane.f32.xlu0 %v1552
        %v1554 = vpop.xlane.xlu0 %1553
        %v1555 = vsel %vm1521, %v1545, 0.0
        %1556 = vadd.xlane.f32.xlu0 %v1555
        %v1557 = vpop.xlane.xlu0 %1556
        %v1558 = vrcp.pop %v1548
        %v1559 = vrcp.pop %v1551
        %v1560 = vrcp.pop %v1554
        %v1561 = vrcp.pop %v1557
        %v1562 = vmul.f32 %v1539, %v1558
        %v1563 = vmul.f32 %v1541, %v1559
        %v1564 = vmul.f32 %v1543, %v1560
        %v1565 = vmul.f32 %v1545, %v1561
        %v1566 = vpack.c.bf16 %v1562, %v1562
        %v1567 = vpack.c.bf16 %v1563, %v1563
        %v1568 = vpack.c.bf16 %v1564, %v1564
        %v1569 = vpack.c.bf16 %v1565, %v1565
        %v1571 = vsel %vm1521, %v1566, 0
        %vm1573 = vcmask 1043456
        %v1575 = vsel %vm1573, %v1332, 0
        %1577 = vmatprep.subr.bf16.mxu0 0
        %1578 = vmatpush1.bf16.msra.mxu0 0
        %1579 = vmatprep.subr.bf16.mxu0 0
        %1580 = vmatpush1.bf16.msra.mxu0 0
        %1581 = vmatprep.subr.bf16.mxu0 0
        %1582 = vmatpush1.bf16.msra.mxu0 0
        %1583 = vmatprep.subr.bf16.mxu0 0
        %1584 = vmatpush1.bf16.msra.mxu0 0
        %1585 = vmatprep.subr.bf16.mxu0 0
        %1586 = vmatpush1.bf16.msra.mxu0 0
        %1587 = vmatprep.subr.bf16.mxu0 0
        %1588 = vmatpush1.bf16.msra.mxu0 0
        %1589 = vmatprep.subr.bf16.mxu0 0
        %1590 = vmatpush1.bf16.msra.mxu0 0
        %1591 = vmatprep.subr.bf16.mxu0 0
        %1592 = vmatpush1.bf16.msra.mxu0 %v1575
        %1593 = vmatprep.subr.bf16.mxu0 0
        %1594 = vmatpush2.bf16.msra.mxu0 0
        %1595 = vmatprep.subr.bf16.mxu0 0
        %1596 = vmatpush2.bf16.msra.mxu0 0
        %1597 = vmatprep.subr.bf16.mxu0 0
        %1598 = vmatpush2.bf16.msra.mxu0 0
        %1599 = vmatprep.subr.bf16.mxu0 0
        %1600 = vmatpush2.bf16.msra.mxu0 0
        %1601 = vmatprep.subr.bf16.mxu0 0
        %1602 = vmatpush2.bf16.msra.mxu0 0
        %1603 = vmatprep.subr.bf16.mxu0 0
        %1604 = vmatpush2.bf16.msra.mxu0 0
        %1605 = vmatprep.subr.bf16.mxu0 0
        %1606 = vmatpush2.bf16.msra.mxu0 0
        %1607 = vmatprep.subr.bf16.mxu0 0
        %1608 = vmatpush2.bf16.msra.mxu0 0
        %1609 = vmatprep.mubr.bf16.mxu0 0
        %1610 = vmatmul.mubr.bf16.gmra.mxu0 %v1571
        %v1611 = vpop.f32.mrf.mxu0
        %v1612 = vadd.f32 0.0, %v1611
        %v1613 = vpop.f32.mrf.mxu0
        %v1614 = vpop.f32.mrf.mxu0
        %v1615 = vpop.f32.mrf.mxu0
        %1616 = vdwg.mxu0
        %v1618 = vsel %vm1521, %v1567, 0
        %v1621 = vsel %vm1573, %v1333, 0
        %1623 = vmatprep.subr.bf16.mxu0 0
        %1624 = vmatpush1.bf16.msra.mxu0 0
        %1625 = vmatprep.subr.bf16.mxu0 0
        %1626 = vmatpush1.bf16.msra.mxu0 0
        %1627 = vmatprep.subr.bf16.mxu0 0
        %1628 = vmatpush1.bf16.msra.mxu0 0
        %1629 = vmatprep.subr.bf16.mxu0 0
        %1630 = vmatpush1.bf16.msra.mxu0 0
        %1631 = vmatprep.subr.bf16.mxu0 0
        %1632 = vmatpush1.bf16.msra.mxu0 0
        %1633 = vmatprep.subr.bf16.mxu0 0
        %1634 = vmatpush1.bf16.msra.mxu0 0
        %1635 = vmatprep.subr.bf16.mxu0 0
        %1636 = vmatpush1.bf16.msra.mxu0 0
        %1637 = vmatprep.subr.bf16.mxu0 0
        %1638 = vmatpush1.bf16.msra.mxu0 %v1621
        %1639 = vmatprep.subr.bf16.mxu0 0
        %1640 = vmatpush2.bf16.msra.mxu0 0
        %1641 = vmatprep.subr.bf16.mxu0 0
        %1642 = vmatpush2.bf16.msra.mxu0 0
        %1643 = vmatprep.subr.bf16.mxu0 0
        %1644 = vmatpush2.bf16.msra.mxu0 0
        %1645 = vmatprep.subr.bf16.mxu0 0
        %1646 = vmatpush2.bf16.msra.mxu0 0
        %1647 = vmatprep.subr.bf16.mxu0 0
        %1648 = vmatpush2.bf16.msra.mxu0 0
        %1649 = vmatprep.subr.bf16.mxu0 0
        %1650 = vmatpush2.bf16.msra.mxu0 0
        %1651 = vmatprep.subr.bf16.mxu0 0
        %1652 = vmatpush2.bf16.msra.mxu0 0
        %1653 = vmatprep.subr.bf16.mxu0 0
        %1654 = vmatpush2.bf16.msra.mxu0 0
        %1655 = vmatprep.mubr.bf16.mxu0 0
        %1656 = vmatmul.mubr.bf16.gmra.mxu0 %v1618
        %v1657 = vpop.f32.mrf.mxu0
        %v1658 = vadd.f32 0.0, %v1657
        %v1659 = vpop.f32.mrf.mxu0
        %v1660 = vpop.f32.mrf.mxu0
        %v1661 = vpop.f32.mrf.mxu0
        %1662 = vdwg.mxu0
        %v1664 = vsel %vm1521, %v1568, 0
        %v1667 = vsel %vm1573, %v1334, 0
        %1669 = vmatprep.subr.bf16.mxu0 0
        %1670 = vmatpush1.bf16.msra.mxu0 0
        %1671 = vmatprep.subr.bf16.mxu0 0
        %1672 = vmatpush1.bf16.msra.mxu0 0
        %1673 = vmatprep.subr.bf16.mxu0 0
        %1674 = vmatpush1.bf16.msra.mxu0 0
        %1675 = vmatprep.subr.bf16.mxu0 0
        %1676 = vmatpush1.bf16.msra.mxu0 0
        %1677 = vmatprep.subr.bf16.mxu0 0
        %1678 = vmatpush1.bf16.msra.mxu0 0
        %1679 = vmatprep.subr.bf16.mxu0 0
        %1680 = vmatpush1.bf16.msra.mxu0 0
        %1681 = vmatprep.subr.bf16.mxu0 0
        %1682 = vmatpush1.bf16.msra.mxu0 0
        %1683 = vmatprep.subr.bf16.mxu0 0
        %1684 = vmatpush1.bf16.msra.mxu0 %v1667
        %1685 = vmatprep.subr.bf16.mxu0 0
        %1686 = vmatpush2.bf16.msra.mxu0 0
        %1687 = vmatprep.subr.bf16.mxu0 0
        %1688 = vmatpush2.bf16.msra.mxu0 0
        %1689 = vmatprep.subr.bf16.mxu0 0
        %1690 = vmatpush2.bf16.msra.mxu0 0
        %1691 = vmatprep.subr.bf16.mxu0 0
        %1692 = vmatpush2.bf16.msra.mxu0 0
        %1693 = vmatprep.subr.bf16.mxu0 0
        %1694 = vmatpush2.bf16.msra.mxu0 0
        %1695 = vmatprep.subr.bf16.mxu0 0
        %1696 = vmatpush2.bf16.msra.mxu0 0
        %1697 = vmatprep.subr.bf16.mxu0 0
        %1698 = vmatpush2.bf16.msra.mxu0 0
        %1699 = vmatprep.subr.bf16.mxu0 0
        %1700 = vmatpush2.bf16.msra.mxu0 0
        %1701 = vmatprep.mubr.bf16.mxu0 0
        %1702 = vmatmul.mubr.bf16.gmra.mxu0 %v1664
        %v1703 = vpop.f32.mrf.mxu0
        %v1704 = vadd.f32 0.0, %v1703
        %v1705 = vpop.f32.mrf.mxu0
        %v1706 = vpop.f32.mrf.mxu0
        %v1707 = vpop.f32.mrf.mxu0
        %1708 = vdwg.mxu0
        %v1710 = vsel %vm1521, %v1569, 0
        %v1713 = vsel %vm1573, %v1335, 0
        %1715 = vmatprep.subr.bf16.mxu0 0
        %1716 = vmatpush1.bf16.msra.mxu0 0
        %1717 = vmatprep.subr.bf16.mxu0 0
        %1718 = vmatpush1.bf16.msra.mxu0 0
        %1719 = vmatprep.subr.bf16.mxu0 0
        %1720 = vmatpush1.bf16.msra.mxu0 0
        %1721 = vmatprep.subr.bf16.mxu0 0
        %1722 = vmatpush1.bf16.msra.mxu0 0
        %1723 = vmatprep.subr.bf16.mxu0 0
        %1724 = vmatpush1.bf16.msra.mxu0 0
        %1725 = vmatprep.subr.bf16.mxu0 0
        %1726 = vmatpush1.bf16.msra.mxu0 0
        %1727 = vmatprep.subr.bf16.mxu0 0
        %1728 = vmatpush1.bf16.msra.mxu0 0
        %1729 = vmatprep.subr.bf16.mxu0 0
        %1730 = vmatpush1.bf16.msra.mxu0 %v1713
        %1731 = vmatprep.subr.bf16.mxu0 0
        %1732 = vmatpush2.bf16.msra.mxu0 0
        %1733 = vmatprep.subr.bf16.mxu0 0
        %1734 = vmatpush2.bf16.msra.mxu0 0
        %1735 = vmatprep.subr.bf16.mxu0 0
        %1736 = vmatpush2.bf16.msra.mxu0 0
        %1737 = vmatprep.subr.bf16.mxu0 0
        %1738 = vmatpush2.bf16.msra.mxu0 0
        %1739 = vmatprep.subr.bf16.mxu0 0
        %1740 = vmatpush2.bf16.msra.mxu0 0
        %1741 = vmatprep.subr.bf16.mxu0 0
        %1742 = vmatpush2.bf16.msra.mxu0 0
        %1743 = vmatprep.subr.bf16.mxu0 0
        %1744 = vmatpush2.bf16.msra.mxu0 0
        %1745 = vmatprep.subr.bf16.mxu0 0
        %1746 = vmatpush2.bf16.msra.mxu0 0
        %1747 = vmatprep.mubr.bf16.mxu0 0
        %1748 = vmatmul.mubr.bf16.gmra.mxu0 %v1710
        %v1749 = vpop.f32.mrf.mxu0
        %v1750 = vadd.f32 0.0, %v1749
        %v1751 = vpop.f32.mrf.mxu0
        %v1752 = vpop.f32.mrf.mxu0
        %v1753 = vpop.f32.mrf.mxu0
        %1754 = vdwg.mxu0
        %v1755 = vcombine.low %v1612, %v1704
        %v1756 = vcombine.high %v1612, %v1704
        %v1758 = vunpack.c.l.s4 1983009808
        %v1759 = vunpack.c.0.s8 %v1758
        %v1760 = vlaneseq
        %v1761 = vshrl.u32 %v1760, 7
        %v1762 = vsub.s32 %v1759, %v1761
        %v1763 = vrot.slane %v1755, %v1762
        %v1765 = vunpack.c.l.s4 1983009808
        %v1766 = vunpack.c.0.s8 %v1765
        %v1767 = vlaneseq
        %v1768 = vshrl.u32 %v1767, 7
        %v1769 = vsub.s32 %v1766, %v1768
        %v1770 = vrot.slane %v1756, %v1769
        %v1771 = vcombine.low %v1658, %v1750
        %v1772 = vcombine.high %v1658, %v1750
        %v1774 = vunpack.c.l.s4 1983009808
        %v1775 = vunpack.c.0.s8 %v1774
        %v1776 = vlaneseq
        %v1777 = vshrl.u32 %v1776, 7
        %v1778 = vsub.s32 %v1775, %v1777
        %v1779 = vrot.slane %v1771, %v1778
        %v1781 = vunpack.c.l.s4 1983009808
        %v1782 = vunpack.c.0.s8 %v1781
        %v1783 = vlaneseq
        %v1784 = vshrl.u32 %v1783, 7
        %v1785 = vsub.s32 %v1782, %v1784
        %v1786 = vrot.slane %v1772, %v1785
        %v1787 = vcombine.low %v1763, %v1779
        %v1788 = vcombine.high %v1763, %v1779
        %v1790 = vunpack.c.l.s4 1934713408
        %v1791 = vunpack.c.0.s8 %v1790
        %v1792 = vlaneseq
        %v1793 = vshrl.u32 %v1792, 7
        %v1794 = vsub.s32 %v1791, %v1793
        %v1795 = vrot.slane %v1787, %v1794
        %v1797 = vunpack.c.l.s4 1934713408
        %v1798 = vunpack.c.0.s8 %v1797
        %v1799 = vlaneseq
        %v1800 = vshrl.u32 %v1799, 7
        %v1801 = vsub.s32 %v1798, %v1800
        %v1802 = vrot.slane %v1788, %v1801
        %v1803 = vcombine.low %v1770, %v1786
        %v1804 = vcombine.high %v1770, %v1786
        %v1806 = vunpack.c.l.s4 1934713408
        %v1807 = vunpack.c.0.s8 %v1806
        %v1808 = vlaneseq
        %v1809 = vshrl.u32 %v1808, 7
        %v1810 = vsub.s32 %v1807, %v1809
        %v1811 = vrot.slane %v1803, %v1810
        %v1813 = vunpack.c.l.s4 1934713408
        %v1814 = vunpack.c.0.s8 %v1813
        %v1815 = vlaneseq
        %v1816 = vshrl.u32 %v1815, 7
        %v1817 = vsub.s32 %v1814, %v1816
        %v1818 = vrot.slane %v1804, %v1817
        %v1819 = vcombine.high %v1795, 0.0
        %v1820 = vcombine.high %v1802, 0.0
        %v1821 = vcombine.high %v1811, 0.0
        %v1822 = vcombine.high %v1818, 0.0
        %v1823 = vcombine.low %v1795, %v1802
        %v1825 = vunpack.c.l.s4 1983009808
        %v1826 = vunpack.c.0.s8 %v1825
        %v1827 = vlaneseq
        %v1828 = vshrl.u32 %v1827, 7
        %v1829 = vsub.s32 %v1826, %v1828
        %v1830 = vrot.slane %v1823, %v1829
        %v1831 = vcombine.low %v1819, %v1820
        %v1833 = vunpack.c.l.s4 1983009808
        %v1834 = vunpack.c.0.s8 %v1833
        %v1835 = vlaneseq
        %v1836 = vshrl.u32 %v1835, 7
        %v1837 = vsub.s32 %v1834, %v1836
        %v1838 = vrot.slane %v1831, %v1837
        %v1839 = vcombine.low %v1811, %v1818
        %v1841 = vunpack.c.l.s4 1983009808
        %v1842 = vunpack.c.0.s8 %v1841
        %v1843 = vlaneseq
        %v1844 = vshrl.u32 %v1843, 7
        %v1845 = vsub.s32 %v1842, %v1844
        %v1846 = vrot.slane %v1839, %v1845
        %v1847 = vcombine.low %v1821, %v1822
        %v1849 = vunpack.c.l.s4 1983009808
        %v1850 = vunpack.c.0.s8 %v1849
        %v1851 = vlaneseq
        %v1852 = vshrl.u32 %v1851, 7
        %v1853 = vsub.s32 %v1850, %v1852
        %v1854 = vrot.slane %v1847, %v1853
        %v1855 = vcombine.low %v1830, %v1838
        %v1856 = vcombine.high %v1830, %v1838
        %v1858 = vunpack.c.l.s4 1934713408
        %v1859 = vunpack.c.0.s8 %v1858
        %v1860 = vlaneseq
        %v1861 = vshrl.u32 %v1860, 7
        %v1862 = vsub.s32 %v1859, %v1861
        %v1863 = vrot.slane %v1855, %v1862
        %v1865 = vunpack.c.l.s4 1934713408
        %v1866 = vunpack.c.0.s8 %v1865
        %v1867 = vlaneseq
        %v1868 = vshrl.u32 %v1867, 7
        %v1869 = vsub.s32 %v1866, %v1868
        %v1870 = vrot.slane %v1856, %v1869
        %v1871 = vcombine.low %v1846, %v1854
        %v1872 = vcombine.high %v1846, %v1854
        %v1874 = vunpack.c.l.s4 1934713408
        %v1875 = vunpack.c.0.s8 %v1874
        %v1876 = vlaneseq
        %v1877 = vshrl.u32 %v1876, 7
        %v1878 = vsub.s32 %v1875, %v1877
        %v1879 = vrot.slane %v1871, %v1878
        %v1881 = vunpack.c.l.s4 1934713408
        %v1882 = vunpack.c.0.s8 %v1881
        %v1883 = vlaneseq
        %v1884 = vshrl.u32 %v1883, 7
        %v1885 = vsub.s32 %v1882, %v1884
        %v1886 = vrot.slane %v1872, %v1885
        %v1887 = vcombine.low %v1863, %v1879
        %v1888 = vcombine.high %v1863, %v1879
        %v1889 = vcombine.low %v1870, %v1886
        %v1890 = vcombine.high %v1870, %v1886
        %1892 = vrot.lane.b32.xlu0 %v1888, 32
        %v1893 = vpop.permute.xlu0 %1892
        %1896 = vrot.lane.b32.xlu0 %v1889, 64
        %v1897 = vpop.permute.xlu0 %1896
        %1900 = vrot.lane.b32.xlu0 %v1890, 96
        %v1901 = vpop.permute.xlu0 %1900
        %v1903 = vsel %vm1336, %v1887, %v1893
        %vm1904 = vcmask 523264
        %v1905 = vsel %vm1904, %v1903, %v1897
        %vm1906 = vcmask 785408
        %v1907 = vsel %vm1906, %v1905, %v1901
        %v1908 = vpack.c.bf16 %v1907, %v1907
        %v1909 = vld [vmem:[#allocation13] sm:$0xf]
        %v1910 = vld [vmem:[#allocation13 + $0x4] sm:$0xf]
        %v1911 = vld [vmem:[#allocation13 + $0x8] sm:$0xf]
        %v1912 = vld [vmem:[#allocation13 + $0xc] sm:$0xf]
        %v1913 = vld [vmem:[#allocation13 + $0x10] sm:$0xf]
        %v1914 = vld [vmem:[#allocation13 + $0x14] sm:$0xf]
        %v1915 = vld [vmem:[#allocation13 + $0x18] sm:$0xf]
        %v1916 = vld [vmem:[#allocation13 + $0x1c] sm:$0xf]
        %v1917 = vld [vmem:[#allocation13 + $0x20] sm:$0xf]
        %v1918 = vld [vmem:[#allocation13 + $0x24] sm:$0xf]
        %v1919 = vld [vmem:[#allocation13 + $0x28] sm:$0xf]
        %v1920 = vld [vmem:[#allocation13 + $0x2c] sm:$0xf]
        %v1921 = vld [vmem:[#allocation13 + $0x30] sm:$0xf]
        %v1922 = vld [vmem:[#allocation13 + $0x34] sm:$0xf]
        %v1923 = vld [vmem:[#allocation13 + $0x38] sm:$0xf]
        %v1924 = vld [vmem:[#allocation13 + $0x3c] sm:$0xf]
        %v1925 = vld [vmem:[%s10] sm:$0x1]
        %v1927 = vlaneseq
        %v1928 = vshrl.u32 %v1927, 7
        %v1929 = vsub.s32 0, %v1928
        %v1930 = vrot.slane %v1925, %v1929
        %v1948 = vunpack.c.l.b16 %v1909
        %v1949 = vunpack.c.l.b16 %v1910
        %v1950 = vunpack.c.l.b16 %v1911
        %v1951 = vunpack.c.l.b16 %v1912
        %v1952 = vunpack.c.l.b16 %v1913
        %v1953 = vunpack.c.l.b16 %v1914
        %v1954 = vunpack.c.l.b16 %v1915
        %v1955 = vunpack.c.l.b16 %v1916
        %v1956 = vunpack.c.l.b16 %v1917
        %v1957 = vunpack.c.l.b16 %v1918
        %v1958 = vunpack.c.l.b16 %v1919
        %v1959 = vunpack.c.l.b16 %v1920
        %v1960 = vunpack.c.l.b16 %v1921
        %v1961 = vunpack.c.l.b16 %v1922
        %v1962 = vunpack.c.l.b16 %v1923
        %v1963 = vunpack.c.l.b16 %v1924
        %v1964 = vpack.c.b16 %v1949, %v1948
        %v1965 = vpack.c.b16 %v1951, %v1950
        %v1966 = vpack.c.b16 %v1953, %v1952
        %v1967 = vpack.c.b16 %v1955, %v1954
        %v1968 = vpack.c.b16 %v1957, %v1956
        %v1969 = vpack.c.b16 %v1959, %v1958
        %v1970 = vpack.c.b16 %v1961, %v1960
        %v1971 = vpack.c.b16 %v1963, %v1962
        %1980 = vmatprep.subr.bf16.mxu0 0
        %1981 = vmatpush1.bf16.msra.mxu0 %v1971
        %1982 = vmatprep.subr.bf16.mxu0 0
        %1983 = vmatpush1.bf16.msra.mxu0 %v1970
        %1984 = vmatprep.subr.bf16.mxu0 0
        %1985 = vmatpush1.bf16.msra.mxu0 %v1969
        %1986 = vmatprep.subr.bf16.mxu0 0
        %1987 = vmatpush1.bf16.msra.mxu0 %v1968
        %1988 = vmatprep.subr.bf16.mxu0 0
        %1989 = vmatpush1.bf16.msra.mxu0 %v1967
        %1990 = vmatprep.subr.bf16.mxu0 0
        %1991 = vmatpush1.bf16.msra.mxu0 %v1966
        %1992 = vmatprep.subr.bf16.mxu0 0
        %1993 = vmatpush1.bf16.msra.mxu0 %v1965
        %1994 = vmatprep.subr.bf16.mxu0 0
        %1995 = vmatpush1.bf16.msra.mxu0 %v1964
        %1996 = vmatprep.subr.bf16.mxu0 0
        %1997 = vmatpush2.bf16.msra.mxu0 0
        %1998 = vmatprep.subr.bf16.mxu0 0
        %1999 = vmatpush2.bf16.msra.mxu0 0
        %2000 = vmatprep.subr.bf16.mxu0 0
        %2001 = vmatpush2.bf16.msra.mxu0 0
        %2002 = vmatprep.subr.bf16.mxu0 0
        %2003 = vmatpush2.bf16.msra.mxu0 0
        %2004 = vmatprep.subr.bf16.mxu0 0
        %2005 = vmatpush2.bf16.msra.mxu0 0
        %2006 = vmatprep.subr.bf16.mxu0 0
        %2007 = vmatpush2.bf16.msra.mxu0 0
        %2008 = vmatprep.subr.bf16.mxu0 0
        %2009 = vmatpush2.bf16.msra.mxu0 0
        %2010 = vmatprep.subr.bf16.mxu0 0
        %2011 = vmatpush2.bf16.msra.mxu0 0
        %2012 = vmatprep.mubr.bf16.mxu0 0
        %2013 = vmatmul.mubr.bf16.gmra.mxu0 %v1908
        %v2014 = vpop.f32.mrf.mxu0
        %v2015 = vadd.f32 %v1930, %v2014
        %v2016 = vpop.f32.mrf.mxu0
        %v2017 = vpop.f32.mrf.mxu0
        %v2018 = vpop.f32.mrf.mxu0
        %2019 = vdwg.mxu0
        %2020 = vst [vmem:[%s547] sm:$0xff] %v2015
        %s2021 = sand.u32 %s303, 1
        %s2022 = scalar_lea.sflag [#allocation4], %s2021
        %s2023 = sand.u32 %s303, 1
        %s2024 = smul.addr %s2023, 8
        %s2025 = scalar_lea.vmem [#allocation14], %s2024
        // Predicated region
        $region93: #{tpu_custom_call.1} parent=63 // pred_check
          %p2026 = pneg %p313
        $region94: #{tpu_custom_call.1} parent=63 // pred_check_branch
          %2028 = sbr.rel (%p2026) target = $region96
        $region95: #{tpu_custom_call.1} parent=63 // pred_region
          %s2030 = ssub.s32 128, 128
          %2031 = vsyncadd %s2022, %s2030
          %s2032 = sadd.s32 %s38, %s37
          %s2033 = smul.addr %s2032, 128
          %s2034 = scalar_lea.hbm %s11, %s2033
          %s2036 = sshll.u32 %s2025, 4
          %s2037 = int_to_ptr.vmem [resolvable:$true] %s2036
          %2039 = dma.vmem_to_hbm [thread:$0]  %s2037, 128, %s2034, %s2022
        $region96: #{tpu_custom_call.1} parent=63 // pred_fallthru
          _
      $region64: #{tpu_custom_call.1} parent=5 // pred_fallthru
        _
      %p2040 = scmp.le.s32.totalorder 2, %s28
      // Predicated region
      $region97: #{tpu_custom_call.1} parent=5 // pred_check
        %p2041 = pneg %p2040
      $region98: #{tpu_custom_call.1} parent=5 // pred_check_branch
        %2043 = sbr.rel (%p2041) target = $region100
      $region99: #{tpu_custom_call.1} parent=5 // pred_region
        %s2044 = ssub.s32 %s28, 2
        // Predicated region
        $region101: #{tpu_custom_call.1} parent=99 // pred_check
          %p2045 = pneg %p319
        $region102: #{tpu_custom_call.1} parent=99 // pred_check_branch
          %2047 = sbr.rel (%p2045) target = $region104
        $region103: #{tpu_custom_call.1} parent=99 // pred_region
          %s2048 = sand.u32 %s304, 1
          %s2049 = scalar_lea.sflag [#allocation4], %s2048
          %s2050 = sand.u32 %s304, 1
          %s2051 = smul.addr %s2050, 8
          %s2052 = scalar_lea.vmem [#allocation14], %s2051
          %2053 = dma.done %s2049, 128
        $region104: #{tpu_custom_call.1} parent=99 // pred_fallthru
          _
      $region100: #{tpu_custom_call.1} parent=5 // pred_fallthru
        _
    $region6: #{tpu_custom_call.1} parent=1 // loop_footer
      %s32 = sadd.s32 1, %s28
    $region7: #{tpu_custom_call.1} parent=1 // loop_footer_branch
      %27 = sbr.rel target = $region3
    $region8: #{tpu_custom_call.1} parent=1 // loop_exit
      _
    %2054 = vsyncpa [#allocation3], 1
    %s2055 = scalar_lea.sflag [#allocation3], 1
    %2056 = vsyncpa %s2055, 1
    %2057 = vsyncpa [#allocation6], 1
    %s2058 = scalar_lea.sflag [#allocation6], 1
    %2059 = vsyncpa %s2058, 1
    %2060 = vsyncpa [#allocation9], 1
    %2061 = vsyncpa [#allocation12], 1
    %2062 = vsyncpa [#allocation4], 1
    %s2063 = scalar_lea.sflag [#allocation4], 1
    %2064 = vsyncpa %s2063, 1

</llo_original>
